<compile_context>
chip_gen: v7x
topology: tpu7x:2x2x1
jax: 0.10.0
libtpu: 0.0.40
codegen_flags: <defaults>
</compile_context>

<pallas_src>
import functools

import jax
import jax.numpy as jnp
from jax.experimental import pallas as pl
from jax.experimental.pallas import tpu as pltpu


# ----------------------------------------------------------------------------
# Fused per-step kernel (Bt graphs per grid step)
#   h_xx = PReLU(adj @ (seq @ W) + b) * prompt            (4 views)
#   c_x  = sigmoid(mean_n h_xx)                           (2 readouts)
#   ret  = [h00 . Wk(c1+c3) | h22 . Wk(c1+c3)] + 2*bk     (== ret1 + ret2)
# ----------------------------------------------------------------------------
def _graphcl_fused_kernel(seq1_ref, seq2_ref, seqa_ref, seqb_ref,
                          adj_ref, adja_ref, adjb_ref,
                          w_ref, b_ref, prompt_ref, wk_ref, scal_ref,
                          out_ref, *, mxu_dtype):
    Bt, N, F = seq1_ref.shape
    H = w_ref.shape[1]
    NP = out_ref.shape[-1]

    w = w_ref[...].astype(mxu_dtype)        # (F, H)
    bvec = b_ref[...]                       # (1, H)  f32
    prompt = prompt_ref[...]                # (1, H)  f32
    alpha = scal_ref[0]                     # PReLU slope
    bk = scal_ref[1]                        # bilinear bias

    # --- (1) All four views x Bt graphs share W: one (4*Bt*N, F)@(F, H) GEMM.
    seq_all = jnp.concatenate(
        [seq1_ref[...].reshape(Bt * N, F).astype(mxu_dtype),
         seq2_ref[...].reshape(Bt * N, F).astype(mxu_dtype),
         seqa_ref[...].reshape(Bt * N, F).astype(mxu_dtype),
         seqb_ref[...].reshape(Bt * N, F).astype(mxu_dtype)], axis=0)
    xw_all = jnp.dot(seq_all, w, preferred_element_type=jnp.float32)  # (4BtN, H)

    BN = Bt * N
    xw1 = xw_all[0 * BN:1 * BN].reshape(Bt, N, H)
    xw2 = xw_all[1 * BN:2 * BN].reshape(Bt, N, H)
    xwa = xw_all[2 * BN:3 * BN].reshape(Bt, N, H)
    xwb = xw_all[3 * BN:4 * BN].reshape(Bt, N, H)

    # --- (2) h00 / h22 share adj: one (N, N)@(N, 2H) matmul per graph.
    xw12 = jnp.concatenate([xw1, xw2], axis=-1).astype(mxu_dtype)   # (Bt, N, 2H)
    adj = adj_ref[...].astype(mxu_dtype)
    adja = adja_ref[...].astype(mxu_dtype)
    adjb = adjb_ref[...].astype(mxu_dtype)

    pre12 = jnp.einsum('bnm,bmh->bnh', adj, xw12,
                       preferred_element_type=jnp.float32)          # (Bt, N, 2H)
    prea = jnp.einsum('bnm,bmh->bnh', adja, xwa.astype(mxu_dtype),
                      preferred_element_type=jnp.float32)           # (Bt, N, H)
    preb = jnp.einsum('bnm,bmh->bnh', adjb, xwb.astype(mxu_dtype),
                      preferred_element_type=jnp.float32)           # (Bt, N, H)

    b2 = jnp.concatenate([bvec, bvec], axis=-1)        # (1, 2H)
    p2 = jnp.concatenate([prompt, prompt], axis=-1)    # (1, 2H)

    def act(pre, bias, prm):                           # PReLU + prompt, f32 (VPU)
        z = pre + bias
        return jnp.where(z > 0.0, z, alpha * z) * prm

    h0022 = act(pre12, b2, p2)       # (Bt, N, 2H): [..., :H]=h00, [..., H:]=h22
    h11 = act(prea, bvec, prompt)    # (Bt, N, H)
    h33 = act(preb, bvec, prompt)    # (Bt, N, H)

    # --- (3) Readouts (EUP sigmoid) + fused discriminators (linear in c).
    c1 = jax.nn.sigmoid(jnp.mean(h11, axis=1))         # (Bt, H)
    c3 = jax.nn.sigmoid(jnp.mean(h33, axis=1))         # (Bt, H)
    # cw[b, i] = sum_j (c1+c3)[b, j] * Wk[i, j]  == (Wk @ (c1+c3))_i
    cw = jax.lax.dot_general(c1 + c3, wk_ref[...],
                             dimension_numbers=(((1,), (1,)), ((), ())),
                             preferred_element_type=jnp.float32)    # (Bt, H)

    # --- (4) Per-node scores: VPU multiply + XLU lane-reduce, no scratch,
    #         no store->reload roundtrip, single unmasked lane-dense store.
    cwb = cw[:, None, :]                                # (Bt, 1, H)
    sc1 = jnp.sum(h0022[..., :H] * cwb, axis=-1)        # (Bt, N)
    sc2 = jnp.sum(h0022[..., H:] * cwb, axis=-1)        # (Bt, N)
    sc = jnp.concatenate([sc1, sc2], axis=-1)           # (Bt, 2N)
    if NP > 2 * N:  # pad in vregs so the store is one full (Bt, NP) slab
        sc = jnp.concatenate(
            [sc, jnp.zeros((Bt, NP - 2 * N), jnp.float32)], axis=-1)
    out_ref[...] = sc + 2.0 * bk     # padded lanes hold 2*bk, sliced off outside


def _pick_block_b(B, N, F, NP, vmem_budget_bytes=8 << 20):
    """Largest graphs-per-step count that divides B, fits a conservative VMEM
    budget (double-buffered f32 inputs), and keeps >= 2 grid steps when B >= 2
    so v7x megacore sharding still has work for both TensorCores."""
    per_graph = 2 * 4 * (4 * N * F + 3 * N * N + NP)
    bt = max(1, min(B, vmem_budget_bytes // max(per_graph, 1)))
    if B >= 2:
        bt = min(bt, max(1, B // 2))
    while B % bt:
        bt -= 1
    return max(1, bt)


def graphcl_fused(seq1, seq2, seq_a, seq_b, adj, adj_a, adj_b,
                  w, b, alpha, prompt, wk, bk,
                  *, block_b=None, mxu_dtype=jnp.float32):
    B, N, F = seq1.shape
    H = w.shape[1]
    NP = max(128, pl.cdiv(2 * N, 128) * 128)     # lane-dense score slab width
    Bt = _pick_block_b(B, N, F, NP) if block_b is None else block_b
    assert B % Bt == 0, (B, Bt)
    nsteps = B // Bt

    b2 = jnp.asarray(b, jnp.float32).reshape(1, H)
    prompt2 = jnp.asarray(prompt, jnp.float32).reshape(1, H)
    scalars = jnp.asarray([alpha, bk], dtype=jnp.float32)   # SMEM scalars

    # Advisory cost estimate so XLA can schedule around the custom call.
    flops = B * (8 * N * F * H + 8 * N * N * H + 2 * H * H + 4 * N * H)
    transcendentals = B * 2 * H
    bytes_accessed = (B * 4 * (4 * N * F + 3 * N * N + NP)
                      + 4 * (F * H + 2 * H + H * H) + 8)

    seq_spec = pl.BlockSpec((Bt, N, F), lambda i: (i, 0, 0))
    adj_spec = pl.BlockSpec((Bt, N, N), lambda i: (i, 0, 0))

    # Only raise the scoped VMEM limit when the per-step working set needs it
    # (double-buffered inputs + outputs + resident weights + headroom).
    vmem_needed = (2 * Bt * (4 * N * F + 3 * N * N + NP) * 4
                   + (F * H + 2 * H + H * H + 2) * 4 + (1 << 20))
    vmem_limit = None if vmem_needed <= (32 << 20) else min(vmem_needed, 100 << 20)

    kernel = functools.partial(_graphcl_fused_kernel, mxu_dtype=mxu_dtype)

    out = pl.pallas_call(
        kernel,
        out_shape=jax.ShapeDtypeStruct((nsteps, Bt, NP), jnp.float32),
        grid_spec=pltpu.PrefetchScalarGridSpec(
            num_scalar_prefetch=0,
            grid=(nsteps,),
            in_specs=[
                seq_spec, seq_spec, seq_spec, seq_spec,          # seq1/seq2/A/B
                adj_spec, adj_spec, adj_spec,                    # adj/adjA/adjB
                pl.BlockSpec((F, H), lambda i: (0, 0)),          # W
                pl.BlockSpec((1, H), lambda i: (0, 0)),          # b
                pl.BlockSpec((1, H), lambda i: (0, 0)),          # prompt
                pl.BlockSpec((H, H), lambda i: (0, 0)),          # Wk
                pl.BlockSpec(memory_space=pltpu.MemorySpace.SMEM),  # [alpha, bk]
            ],
            out_specs=pl.BlockSpec((pl.Squeezed(), Bt, NP), lambda i: (i, 0, 0)),
        ),
        compiler_params=pltpu.CompilerParams(
            dimension_semantics=("parallel",),
            vmem_limit_bytes=vmem_limit),
        cost_estimate=pl.CostEstimate(flops=flops,
                                      transcendentals=transcendentals,
                                      bytes_accessed=bytes_accessed),
    )(seq1, seq2, seq_a, seq_b, adj, adj_a, adj_b, w, b2, prompt2, wk, scalars)

    return out.reshape(B, NP)[:, :2 * N]         # == torch.cat((sc_1, sc_2), 1)


# ----------------------------------------------------------------------------
# GraphCL forward (aug_type branching in Python, hot path = one fused kernel)
# ----------------------------------------------------------------------------
def graphcl_forward(params, seq1, seq2, seq3, seq4, adj, aug_adj1, aug_adj2,
                    sparse, msk, samp_bias1, samp_bias2, aug_type,
                    **kernel_kwargs):
    del sparse  # dense bmm path only
    assert msk is None and samp_bias1 is None and samp_bias2 is None
    w, b, alpha, prompt, wk, bk = (params["w"], params["b"], params["alpha"],
                                   params["prompt"], params["wk"], params["bk"])

    if aug_type == "edge":
        seq_a, adj_a, seq_b, adj_b = seq1, aug_adj1, seq1, aug_adj2
    elif aug_type == "mask":
        seq_a, adj_a, seq_b, adj_b = seq3, adj, seq4, adj
    elif aug_type in ("node", "subgraph"):
        seq_a, adj_a, seq_b, adj_b = seq3, aug_adj1, seq4, aug_adj2
    else:
        raise AssertionError(aug_type)

    return graphcl_fused(seq1, seq2, seq_a, seq_b, adj, adj_a, adj_b,
                         w, b, alpha, prompt, wk, bk, **kernel_kwargs)


# ----------------------------------------------------------------------------
# Pure-JAX reference (mirrors the torch module op-for-op, for validation)
# ----------------------------------------------------------------------------
def _gcn_prompt_ref(seq, adj, w, b, alpha, prompt):
    xw = jnp.einsum("bnf,fh->bnh", seq, w)
    pre = jnp.einsum("bnm,bmh->bnh", adj, xw) + b.reshape(1, 1, -1)
    h = jnp.where(pre > 0.0, pre, alpha * pre)
    return h * prompt.reshape(1, 1, -1)


def _disc_ref(c, hpl, hmi, wk, bk):
    cw = jnp.einsum("bj,ij->bi", c, wk)
    sc1 = jnp.einsum("bni,bi->bn", hpl, cw) + bk
    sc2 = jnp.einsum("bni,bi->bn", hmi, cw) + bk
    return jnp.concatenate([sc1, sc2], axis=1)


def graphcl_ref(params, seq1, seq2, seq3, seq4, adj, aug_adj1, aug_adj2,
                aug_type):
    w, b, alpha, prompt, wk, bk = (params["w"], params["b"], params["alpha"],
                                   params["prompt"], params["wk"], params["bk"])
    h_00 = _gcn_prompt_ref(seq1, adj, w, b, alpha, prompt)
    if aug_type == "edge":
        h_11 = _gcn_prompt_ref(seq1, aug_adj1, w, b, alpha, prompt)
        h_33 = _gcn_prompt_ref(seq1, aug_adj2, w, b, alpha, prompt)
    elif aug_type == "mask":
        h_11 = _gcn_prompt_ref(seq3, adj, w, b, alpha, prompt)
        h_33 = _gcn_prompt_ref(seq4, adj, w, b, alpha, prompt)
    else:
        h_11 = _gcn_prompt_ref(seq3, aug_adj1, w, b, alpha, prompt)
        h_33 = _gcn_prompt_ref(seq4, aug_adj2, w, b, alpha, prompt)
    c_1 = jax.nn.sigmoid(jnp.mean(h_11, axis=1))
    c_3 = jax.nn.sigmoid(jnp.mean(h_33, axis=1))
    h_22 = _gcn_prompt_ref(seq2, adj, w, b, alpha, prompt)
    return _disc_ref(c_1, h_00, h_22, wk, bk) + _disc_ref(c_3, h_00, h_22, wk, bk)


# ----------------------------------------------------------------------------
# Main
# ----------------------------------------------------------------------------
if __name__ == "__main__":
    def xavier_uniform(k, shape):
        fan_in, fan_out = shape[-2], shape[-1]
        bound = (6.0 / (fan_in + fan_out)) ** 0.5
        return jax.random.uniform(k, shape, jnp.float32, -bound, bound)

    def make_case(key, B, N, F, H):
        ks = jax.random.split(key, 10)
        params = {
            "w": xavier_uniform(ks[0], (F, H)),          # GCN fc weight
            "b": jnp.zeros((H,), jnp.float32),           # GCN bias (init 0.0)
            "alpha": jnp.float32(0.25),                  # PReLU alpha (torch default)
            "prompt": xavier_uniform(ks[1], (1, H)),     # GraphCL prompt
            "wk": xavier_uniform(ks[2], (H, H)),         # Discriminator bilinear W
            "bk": jnp.float32(0.0),                      # Discriminator bilinear bias
        }
        seq1 = jax.random.normal(ks[3], (B, N, F), jnp.float32)
        seq2 = jax.random.normal(ks[4], (B, N, F), jnp.float32)
        seq3 = jax.random.normal(ks[5], (B, N, F), jnp.float32)
        seq4 = jax.random.normal(ks[6], (B, N, F), jnp.float32)
        adj = jax.random.uniform(ks[7], (B, N, N), jnp.float32)
        aug_adj1 = jax.random.uniform(ks[8], (B, N, N), jnp.float32)
        aug_adj2 = jax.random.uniform(ks[9], (B, N, N), jnp.float32)
        return params, (seq1, seq2, seq3, seq4, adj, aug_adj1, aug_adj2)

    key = jax.random.PRNGKey(0)
    k1, k2 = jax.random.split(key)

    # Case 1: small shapes, f32 MXU path, default block_b (grid keeps 2 steps).
    B, N, F, H = 2, 8, 16, 32
    params, data = make_case(k1, B, N, F, H)
    ret = graphcl_forward(params, *data, sparse=False, msk=None,
                          samp_bias1=None, samp_bias2=None, aug_type="node")
    ret = jax.block_until_ready(ret)
    assert ret.shape == (B, 2 * N), ret.shape
    ref = graphcl_ref(params, *data, "node")
    assert jnp.allclose(ret, ref, rtol=2e-3, atol=2e-3), (
        "f32 mismatch", float(jnp.max(jnp.abs(ret - ref))))

    # Case 2: larger batch exercises Bt>1 graph blocking (2 steps of 4 graphs).
    params8, data8 = make_case(k2, 8, N, F, H)
    ret8 = graphcl_forward(params8, *data8, sparse=False, msk=None,
                           samp_bias1=None, samp_bias2=None, aug_type="edge")
    ret8 = jax.block_until_ready(ret8)
    ref8 = graphcl_ref(params8, *data8, "edge")
    assert ret8.shape == (8, 2 * N), ret8.shape
    assert jnp.allclose(ret8, ref8, rtol=2e-3, atol=2e-3), (
        "blocked mismatch", float(jnp.max(jnp.abs(ret8 - ref8))))

    # Case 3: bf16 MXU operands (production setting for large N/F/H).
    ret_bf = graphcl_forward(params, *data, sparse=False, msk=None,
                             samp_bias1=None, samp_bias2=None, aug_type="node",
                             mxu_dtype=jnp.bfloat16)
    ret_bf = jax.block_until_ready(ret_bf)
    assert jnp.allclose(ret_bf, ref, rtol=5e-2, atol=2.5e-1), (
        "bf16 mismatch", float(jnp.max(jnp.abs(ret_bf - ref))))

    print("KERNEL_OK")
</pallas_src>

<mosaic_0001>
module attributes {stable_mosaic.version = 11 : i64} {
  func.func @_graphcl_fused_kernel(%arg0: i32, %arg1: memref<1x8x16xf32, #tpu.memory_space<vmem>>, %arg2: memref<1x8x16xf32, #tpu.memory_space<vmem>>, %arg3: memref<1x8x16xf32, #tpu.memory_space<vmem>>, %arg4: memref<1x8x16xf32, #tpu.memory_space<vmem>>, %arg5: memref<1x8x8xf32, #tpu.memory_space<vmem>>, %arg6: memref<1x8x8xf32, #tpu.memory_space<vmem>>, %arg7: memref<1x8x8xf32, #tpu.memory_space<vmem>>, %arg8: memref<16x32xf32, #tpu.memory_space<vmem>>, %arg9: memref<1x32xf32, #tpu.memory_space<vmem>>, %arg10: memref<1x32xf32, #tpu.memory_space<vmem>>, %arg11: memref<32x32xf32, #tpu.memory_space<vmem>>, %arg12: memref<2xf32, #tpu.memory_space<smem>>, %arg13: memref<1x1x128xf32, #tpu.memory_space<vmem>>) attributes {dimension_semantics = [#tpu.dimension_semantics<parallel>], iteration_bounds = array<i64: 2>, scalar_prefetch = 0 : i64, scratch_operands = 0 : i64, tpu.core_type = #tpu.core_type<tc>, window_params = [{transform_indices = @transform_0, window_bounds = array<i64: 1, 8, 16>}, {transform_indices = @transform_1, window_bounds = array<i64: 1, 8, 16>}, {transform_indices = @transform_2, window_bounds = array<i64: 1, 8, 16>}, {transform_indices = @transform_3, window_bounds = array<i64: 1, 8, 16>}, {transform_indices = @transform_4, window_bounds = array<i64: 1, 8, 8>}, {transform_indices = @transform_5, window_bounds = array<i64: 1, 8, 8>}, {transform_indices = @transform_6, window_bounds = array<i64: 1, 8, 8>}, {pipeline_mode = #tpu.pipeline_mode<synchronous>, transform_indices = @transform_7, window_bounds = array<i64: 16, 32>}, {pipeline_mode = #tpu.pipeline_mode<synchronous>, transform_indices = @transform_8, window_bounds = array<i64: 1, 32>}, {pipeline_mode = #tpu.pipeline_mode<synchronous>, transform_indices = @transform_9, window_bounds = array<i64: 1, 32>}, {pipeline_mode = #tpu.pipeline_mode<synchronous>, transform_indices = @transform_10, window_bounds = array<i64: 32, 32>}, {transform_indices = @transform_11, window_bounds = array<i64: 2>}, {transform_indices = @transform_12, window_bounds = array<i64: 1, 1, 128>}]} {
    %c0 = arith.constant 0 : index
    %c0_0 = arith.constant 0 : index
    %0 = vector.load %arg8[%c0, %c0_0] : memref<16x32xf32, #tpu.memory_space<vmem>>, vector<16x32xf32>
    %c0_1 = arith.constant 0 : index
    %c0_2 = arith.constant 0 : index
    %1 = vector.load %arg9[%c0_1, %c0_2] : memref<1x32xf32, #tpu.memory_space<vmem>>, vector<1x32xf32>
    %c0_3 = arith.constant 0 : index
    %c0_4 = arith.constant 0 : index
    %2 = vector.load %arg10[%c0_3, %c0_4] : memref<1x32xf32, #tpu.memory_space<vmem>>, vector<1x32xf32>
    %c0_5 = arith.constant 0 : index
    %3 = memref.load %arg12[%c0_5] : memref<2xf32, #tpu.memory_space<smem>>
    %c1 = arith.constant 1 : index
    %4 = memref.load %arg12[%c1] : memref<2xf32, #tpu.memory_space<smem>>
    %c0_6 = arith.constant 0 : index
    %c0_7 = arith.constant 0 : index
    %c0_8 = arith.constant 0 : index
    %5 = vector.load %arg1[%c0_6, %c0_7, %c0_8] : memref<1x8x16xf32, #tpu.memory_space<vmem>>, vector<1x8x16xf32>
    %6 = vector.shape_cast %5 : vector<1x8x16xf32> to vector<8x16xf32>
    %c0_9 = arith.constant 0 : index
    %c0_10 = arith.constant 0 : index
    %c0_11 = arith.constant 0 : index
    %7 = vector.load %arg2[%c0_9, %c0_10, %c0_11] : memref<1x8x16xf32, #tpu.memory_space<vmem>>, vector<1x8x16xf32>
    %8 = vector.shape_cast %7 : vector<1x8x16xf32> to vector<8x16xf32>
    %c0_12 = arith.constant 0 : index
    %c0_13 = arith.constant 0 : index
    %c0_14 = arith.constant 0 : index
    %9 = vector.load %arg3[%c0_12, %c0_13, %c0_14] : memref<1x8x16xf32, #tpu.memory_space<vmem>>, vector<1x8x16xf32>
    %10 = vector.shape_cast %9 : vector<1x8x16xf32> to vector<8x16xf32>
    %c0_15 = arith.constant 0 : index
    %c0_16 = arith.constant 0 : index
    %c0_17 = arith.constant 0 : index
    %11 = vector.load %arg4[%c0_15, %c0_16, %c0_17] : memref<1x8x16xf32, #tpu.memory_space<vmem>>, vector<1x8x16xf32>
    %12 = vector.shape_cast %11 : vector<1x8x16xf32> to vector<8x16xf32>
    %13 = tpu.concatenate %6, %8, %10, %12 in 0 : vector<8x16xf32>, vector<8x16xf32>, vector<8x16xf32>, vector<8x16xf32> -> vector<32x16xf32>
    %cst = arith.constant dense<0.000000e+00> : vector<32x32xf32>
    %14 = tpu.matmul %13, %0, %cst {dimension_numbers = #tpu.dot_dimension_numbers<[1], [0], [0], [1], [0, 0, 1, 1], [], []>} : vector<32x16xf32>, vector<16x32xf32>, vector<32x32xf32> -> vector<32x32xf32>
    %15 = vector.extract_strided_slice %14 {offsets = [0, 0], sizes = [8, 32], strides = [1, 1]} : vector<32x32xf32> to vector<8x32xf32>
    %16 = vector.shape_cast %15 : vector<8x32xf32> to vector<1x8x32xf32>
    %17 = vector.extract_strided_slice %14 {offsets = [8, 0], sizes = [8, 32], strides = [1, 1]} : vector<32x32xf32> to vector<8x32xf32>
    %18 = vector.shape_cast %17 : vector<8x32xf32> to vector<1x8x32xf32>
    %19 = vector.extract_strided_slice %14 {offsets = [16, 0], sizes = [8, 32], strides = [1, 1]} : vector<32x32xf32> to vector<8x32xf32>
    %20 = vector.shape_cast %19 : vector<8x32xf32> to vector<1x8x32xf32>
    %21 = vector.extract_strided_slice %14 {offsets = [24, 0], sizes = [8, 32], strides = [1, 1]} : vector<32x32xf32> to vector<8x32xf32>
    %22 = vector.shape_cast %21 : vector<8x32xf32> to vector<1x8x32xf32>
    %23 = tpu.concatenate %16, %18 in 2 : vector<1x8x32xf32>, vector<1x8x32xf32> -> vector<1x8x64xf32>
    %c0_18 = arith.constant 0 : index
    %c0_19 = arith.constant 0 : index
    %c0_20 = arith.constant 0 : index
    %24 = vector.load %arg5[%c0_18, %c0_19, %c0_20] : memref<1x8x8xf32, #tpu.memory_space<vmem>>, vector<1x8x8xf32>
    %c0_21 = arith.constant 0 : index
    %c0_22 = arith.constant 0 : index
    %c0_23 = arith.constant 0 : index
    %25 = vector.load %arg6[%c0_21, %c0_22, %c0_23] : memref<1x8x8xf32, #tpu.memory_space<vmem>>, vector<1x8x8xf32>
    %c0_24 = arith.constant 0 : index
    %c0_25 = arith.constant 0 : index
    %c0_26 = arith.constant 0 : index
    %26 = vector.load %arg7[%c0_24, %c0_25, %c0_26] : memref<1x8x8xf32, #tpu.memory_space<vmem>>, vector<1x8x8xf32>
    "tpu.trace_start"() <{level = 10 : i32, message = "bnm,bmh->bnh"}> : () -> ()
    %cst_27 = arith.constant dense<0.000000e+00> : vector<1x8x64xf32>
    %27 = tpu.matmul %24, %23, %cst_27 {dimension_numbers = #tpu.dot_dimension_numbers<[2], [1], [1], [2], [0, 0, 0, 1, 1, 2], [0], [0]>} : vector<1x8x8xf32>, vector<1x8x64xf32>, vector<1x8x64xf32> -> vector<1x8x64xf32>
    %cst_28 = arith.constant dense<0.000000e+00> : vector<1x8x32xf32>
    %28 = tpu.matmul %25, %20, %cst_28 {dimension_numbers = #tpu.dot_dimension_numbers<[2], [1], [1], [2], [0, 0, 0, 1, 1, 2], [0], [0]>} : vector<1x8x8xf32>, vector<1x8x32xf32>, vector<1x8x32xf32> -> vector<1x8x32xf32>
    %cst_29 = arith.constant dense<0.000000e+00> : vector<1x8x32xf32>
    %29 = tpu.matmul %26, %22, %cst_29 {dimension_numbers = #tpu.dot_dimension_numbers<[2], [1], [1], [2], [0, 0, 0, 1, 1, 2], [0], [0]>} : vector<1x8x8xf32>, vector<1x8x32xf32>, vector<1x8x32xf32> -> vector<1x8x32xf32>
    "tpu.trace_stop"() : () -> ()
    %30 = tpu.concatenate %1, %1 in 1 : vector<1x32xf32>, vector<1x32xf32> -> vector<1x64xf32>
    %31 = tpu.concatenate %2, %2 in 1 : vector<1x32xf32>, vector<1x32xf32> -> vector<1x64xf32>
    %32 = vector.shape_cast %30 : vector<1x64xf32> to vector<1x1x64xf32>
    %33 = vector.broadcast %32 : vector<1x1x64xf32> to vector<1x8x64xf32>
    %34 = arith.addf %27, %33 : vector<1x8x64xf32>
    %cst_30 = arith.constant 0.000000e+00 : f32
    %35 = vector.broadcast %cst_30 : f32 to vector<1x8x64xf32>
    %36 = arith.cmpf ogt, %34, %35 : vector<1x8x64xf32>
    %37 = vector.broadcast %3 : f32 to vector<1x8x64xf32>
    %38 = arith.mulf %37, %34 : vector<1x8x64xf32>
    %39 = arith.select %36, %34, %38 : vector<1x8x64xi1>, vector<1x8x64xf32>
    %40 = vector.shape_cast %31 : vector<1x64xf32> to vector<1x1x64xf32>
    %41 = vector.broadcast %40 : vector<1x1x64xf32> to vector<1x8x64xf32>
    %42 = arith.mulf %39, %41 : vector<1x8x64xf32>
    %43 = vector.shape_cast %1 : vector<1x32xf32> to vector<1x1x32xf32>
    %44 = vector.broadcast %43 : vector<1x1x32xf32> to vector<1x8x32xf32>
    %45 = arith.addf %28, %44 : vector<1x8x32xf32>
    %cst_31 = arith.constant 0.000000e+00 : f32
    %46 = vector.broadcast %cst_31 : f32 to vector<1x8x32xf32>
    %47 = arith.cmpf ogt, %45, %46 : vector<1x8x32xf32>
    %48 = vector.broadcast %3 : f32 to vector<1x8x32xf32>
    %49 = arith.mulf %48, %45 : vector<1x8x32xf32>
    %50 = arith.select %47, %45, %49 : vector<1x8x32xi1>, vector<1x8x32xf32>
    %51 = vector.shape_cast %2 : vector<1x32xf32> to vector<1x1x32xf32>
    %52 = vector.broadcast %51 : vector<1x1x32xf32> to vector<1x8x32xf32>
    %53 = arith.mulf %50, %52 : vector<1x8x32xf32>
    %54 = vector.shape_cast %1 : vector<1x32xf32> to vector<1x1x32xf32>
    %55 = vector.broadcast %54 : vector<1x1x32xf32> to vector<1x8x32xf32>
    %56 = arith.addf %29, %55 : vector<1x8x32xf32>
    %cst_32 = arith.constant 0.000000e+00 : f32
    %57 = vector.broadcast %cst_32 : f32 to vector<1x8x32xf32>
    %58 = arith.cmpf ogt, %56, %57 : vector<1x8x32xf32>
    %59 = vector.broadcast %3 : f32 to vector<1x8x32xf32>
    %60 = arith.mulf %59, %56 : vector<1x8x32xf32>
    %61 = arith.select %58, %56, %60 : vector<1x8x32xi1>, vector<1x8x32xf32>
    %62 = vector.shape_cast %2 : vector<1x32xf32> to vector<1x1x32xf32>
    %63 = vector.broadcast %62 : vector<1x1x32xf32> to vector<1x8x32xf32>
    %64 = arith.mulf %61, %63 : vector<1x8x32xf32>
    %cst_33 = arith.constant dense<0.000000e+00> : vector<1x32xf32>
    %65 = vector.multi_reduction <add>, %53, %cst_33 [1] : vector<1x8x32xf32> to vector<1x32xf32>
    %cst_34 = arith.constant 8.000000e+00 : f32
    %66 = vector.broadcast %cst_34 : f32 to vector<1x32xf32>
    %67 = arith.divf %65, %66 : vector<1x32xf32>
    %68 = arith.negf %67 : vector<1x32xf32>
    %69 = math.exp %68 : vector<1x32xf32>
    %cst_35 = arith.constant 1.000000e+00 : f32
    %70 = vector.broadcast %cst_35 : f32 to vector<1x32xf32>
    %71 = arith.addf %70, %69 : vector<1x32xf32>
    %72 = arith.divf %70, %71 : vector<1x32xf32>
    %cst_36 = arith.constant dense<0.000000e+00> : vector<1x32xf32>
    %73 = vector.multi_reduction <add>, %64, %cst_36 [1] : vector<1x8x32xf32> to vector<1x32xf32>
    %cst_37 = arith.constant 8.000000e+00 : f32
    %74 = vector.broadcast %cst_37 : f32 to vector<1x32xf32>
    %75 = arith.divf %73, %74 : vector<1x32xf32>
    %76 = arith.negf %75 : vector<1x32xf32>
    %77 = math.exp %76 : vector<1x32xf32>
    %cst_38 = arith.constant 1.000000e+00 : f32
    %78 = vector.broadcast %cst_38 : f32 to vector<1x32xf32>
    %79 = arith.addf %78, %77 : vector<1x32xf32>
    %80 = arith.divf %78, %79 : vector<1x32xf32>
    %81 = arith.addf %72, %80 : vector<1x32xf32>
    %c0_39 = arith.constant 0 : index
    %c0_40 = arith.constant 0 : index
    %82 = vector.load %arg11[%c0_39, %c0_40] : memref<32x32xf32, #tpu.memory_space<vmem>>, vector<32x32xf32>
    %cst_41 = arith.constant dense<0.000000e+00> : vector<1x32xf32>
    %83 = tpu.matmul %81, %82, %cst_41 {dimension_numbers = #tpu.dot_dimension_numbers<[1], [1], [0], [0], [0, 0, 1, 0], [], []>} : vector<1x32xf32>, vector<32x32xf32>, vector<1x32xf32> -> vector<1x32xf32>
    %84 = vector.shape_cast %83 : vector<1x32xf32> to vector<1x1x32xf32>
    %85 = vector.extract_strided_slice %42 {offsets = [0, 0, 0], sizes = [1, 8, 32], strides = [1, 1, 1]} : vector<1x8x64xf32> to vector<1x8x32xf32>
    %86 = vector.broadcast %84 : vector<1x1x32xf32> to vector<1x8x32xf32>
    %87 = arith.mulf %85, %86 : vector<1x8x32xf32>
    %cst_42 = arith.constant dense<0.000000e+00> : vector<1x8xf32>
    %88 = vector.multi_reduction <add>, %87, %cst_42 [2] : vector<1x8x32xf32> to vector<1x8xf32>
    %89 = vector.extract_strided_slice %42 {offsets = [0, 0, 32], sizes = [1, 8, 32], strides = [1, 1, 1]} : vector<1x8x64xf32> to vector<1x8x32xf32>
    %90 = vector.broadcast %84 : vector<1x1x32xf32> to vector<1x8x32xf32>
    %91 = arith.mulf %89, %90 : vector<1x8x32xf32>
    %cst_43 = arith.constant dense<0.000000e+00> : vector<1x8xf32>
    %92 = vector.multi_reduction <add>, %91, %cst_43 [2] : vector<1x8x32xf32> to vector<1x8xf32>
    %93 = tpu.concatenate %88, %92 in 1 : vector<1x8xf32>, vector<1x8xf32> -> vector<1x16xf32>
    %cst_44 = arith.constant 0.000000e+00 : f32
    %94 = vector.broadcast %cst_44 : f32 to vector<1x112xf32>
    %95 = tpu.concatenate %93, %94 in 1 : vector<1x16xf32>, vector<1x112xf32> -> vector<1x128xf32>
    %cst_45 = arith.constant 2.000000e+00 : f32
    %96 = arith.mulf %cst_45, %4 : f32
    %97 = vector.broadcast %96 : f32 to vector<1x128xf32>
    %98 = arith.addf %95, %97 : vector<1x128xf32>
    %c0_46 = arith.constant 0 : index
    %c0_47 = arith.constant 0 : index
    %c0_48 = arith.constant 0 : index
    %99 = vector.load %arg13[%c0_46, %c0_47, %c0_48] : memref<1x1x128xf32, #tpu.memory_space<vmem>>, vector<1x1x128xf32>
    %100 = vector.shape_cast %99 : vector<1x1x128xf32> to vector<1x128xf32>
    %101 = vector.shape_cast %98 : vector<1x128xf32> to vector<1x1x128xf32>
    tpu.vector_store %arg13[%c0_46, %c0_47, %c0_48], %101 {strides = array<i32>} : memref<1x1x128xf32, #tpu.memory_space<vmem>>, vector<1x1x128xf32>,
    return
  }
  func.func @transform_0(%arg0: i32) -> (i32, i32, i32) {
    %c0_i32 = arith.constant 0 : i32
    %c0_i32_0 = arith.constant 0 : i32
    %c0_i32_1 = arith.constant 0 : i32
    return %arg0, %c0_i32, %c0_i32_0 : i32, i32, i32
  }
  func.func @transform_1(%arg0: i32) -> (i32, i32, i32) {
    %c0_i32 = arith.constant 0 : i32
    %c0_i32_0 = arith.constant 0 : i32
    %c0_i32_1 = arith.constant 0 : i32
    return %arg0, %c0_i32, %c0_i32_0 : i32, i32, i32
  }
  func.func @transform_2(%arg0: i32) -> (i32, i32, i32) {
    %c0_i32 = arith.constant 0 : i32
    %c0_i32_0 = arith.constant 0 : i32
    %c0_i32_1 = arith.constant 0 : i32
    return %arg0, %c0_i32, %c0_i32_0 : i32, i32, i32
  }
  func.func @transform_3(%arg0: i32) -> (i32, i32, i32) {
    %c0_i32 = arith.constant 0 : i32
    %c0_i32_0 = arith.constant 0 : i32
    %c0_i32_1 = arith.constant 0 : i32
    return %arg0, %c0_i32, %c0_i32_0 : i32, i32, i32
  }
  func.func @transform_4(%arg0: i32) -> (i32, i32, i32) {
    %c0_i32 = arith.constant 0 : i32
    %c0_i32_0 = arith.constant 0 : i32
    %c0_i32_1 = arith.constant 0 : i32
    return %arg0, %c0_i32, %c0_i32_0 : i32, i32, i32
  }
  func.func @transform_5(%arg0: i32) -> (i32, i32, i32) {
    %c0_i32 = arith.constant 0 : i32
    %c0_i32_0 = arith.constant 0 : i32
    %c0_i32_1 = arith.constant 0 : i32
    return %arg0, %c0_i32, %c0_i32_0 : i32, i32, i32
  }
  func.func @transform_6(%arg0: i32) -> (i32, i32, i32) {
    %c0_i32 = arith.constant 0 : i32
    %c0_i32_0 = arith.constant 0 : i32
    %c0_i32_1 = arith.constant 0 : i32
    return %arg0, %c0_i32, %c0_i32_0 : i32, i32, i32
  }
  func.func @transform_7(%arg0: i32) -> (i32, i32) {
    %c0_i32 = arith.constant 0 : i32
    %c0_i32_0 = arith.constant 0 : i32
    %c0_i32_1 = arith.constant 0 : i32
    return %c0_i32, %c0_i32_0 : i32, i32
  }
  func.func @transform_8(%arg0: i32) -> (i32, i32) {
    %c0_i32 = arith.constant 0 : i32
    %c0_i32_0 = arith.constant 0 : i32
    %c0_i32_1 = arith.constant 0 : i32
    return %c0_i32, %c0_i32_0 : i32, i32
  }
  func.func @transform_9(%arg0: i32) -> (i32, i32) {
    %c0_i32 = arith.constant 0 : i32
    %c0_i32_0 = arith.constant 0 : i32
    %c0_i32_1 = arith.constant 0 : i32
    return %c0_i32, %c0_i32_0 : i32, i32
  }
  func.func @transform_10(%arg0: i32) -> (i32, i32) {
    %c0_i32 = arith.constant 0 : i32
    %c0_i32_0 = arith.constant 0 : i32
    %c0_i32_1 = arith.constant 0 : i32
    return %c0_i32, %c0_i32_0 : i32, i32
  }
  func.func @transform_11(%arg0: i32) -> i32 {
    %c0_i32 = arith.constant 0 : i32
    %c0_i32_0 = arith.constant 0 : i32
    return %c0_i32 : i32
  }
  func.func @transform_12(%arg0: i32) -> (i32, i32, i32) {
    %c0_i32 = arith.constant 0 : i32
    %c0_i32_0 = arith.constant 0 : i32
    %c0_i32_1 = arith.constant 0 : i32
    return %arg0, %c0_i32, %c0_i32_0 : i32, i32, i32
  }
}

</mosaic_0001>

<llo_original>
// kernel: tpu_custom_call.1
$region0: #{tpu_custom_call.1}
  #allocation0 [shape = 'u32[]', space=smem, size = 0x4, offset = 0x4, fixed_abs, tag = 'smem constant byte address 0x4 - core index']
  #allocation1 [shape = 'u32[144,128]{1,0:T(1,128)}', space=vmem, size = 0x12000, scoped, tag = 'internal scratch']
  %s0 = inlined_call_operand.hbm [shape: f32[2,8,16], index: 0, kind: input, shape index: {}]
  %s1 = inlined_call_operand.hbm [shape: f32[2,8,16], index: 1, kind: input, shape index: {}]
  %s2 = inlined_call_operand.hbm [shape: f32[2,8,16], index: 2, kind: input, shape index: {}]
  %s3 = inlined_call_operand.hbm [shape: f32[2,8,16], index: 3, kind: input, shape index: {}]
  %s4 = inlined_call_operand.hbm [shape: f32[2,8,8], index: 4, kind: input, shape index: {}]
  %s5 = inlined_call_operand.hbm [shape: f32[2,8,8], index: 5, kind: input, shape index: {}]
  %s6 = inlined_call_operand.hbm [shape: f32[2,8,8], index: 6, kind: input, shape index: {}]
  %s7 = inlined_call_operand.hbm [shape: f32[16,32], index: 7, kind: input, shape index: {}]
  %s8 = inlined_call_operand.vmem [shape: f32[1,32], index: 8, kind: input, shape index: {}]
  %s9 = inlined_call_operand.vmem [shape: f32[1,32], index: 9, kind: input, shape index: {}]
  %s10 = inlined_call_operand.vmem [shape: f32[32,32], index: 10, kind: input, shape index: {}]
  %s11 = inlined_call_operand.vmem [shape: f32[2], index: 11, kind: input, shape index: {}]
  %s12 = inlined_call_operand.hbm [shape: f32[2,1,128], index: 12, kind: output, shape index: {}]
  %s13 = sld [smem:[#allocation0]]
  $region117: #{tpu_custom_call.1} parent=0
    _
  %s15 = ssub.s32 1, %s13
  %s16 = scalar_select 0, %s15, %s13
  $region1: #{tpu_custom_call.1} parent=0
    #allocation2 [shape = 'u8[8192]{0}', space=vmem, size = 0x2000, scoped, tag = 'input window, operand 0']
    #allocation3 [shape = 's32[2]{0}', space=sflag, size = 0x8, scoped, tag = 'scoped memory for tpu_custom_call.1']
    #allocation4 [shape = 's32[2]{0}', space=sflag, size = 0x8, scoped, tag = 'scoped memory for tpu_custom_call.1']
    #allocation5 [shape = 's32[2]{0}', space=sflag, size = 0x8, scoped, tag = 'scoped memory for tpu_custom_call.1']
    #allocation6 [shape = 'u8[8192]{0}', space=vmem, size = 0x2000, scoped, tag = 'input window, operand 1']
    #allocation7 [shape = 's32[2]{0}', space=sflag, size = 0x8, scoped, tag = 'scoped memory for tpu_custom_call.1']
    #allocation8 [shape = 'u8[8192]{0}', space=vmem, size = 0x2000, scoped, tag = 'input window, operand 2']
    #allocation9 [shape = 'u8[8192]{0}', space=vmem, size = 0x2000, scoped, tag = 'input window, operand 3']
    #allocation10 [shape = 's32[2]{0}', space=sflag, size = 0x8, scoped, tag = 'scoped memory for tpu_custom_call.1']
    #allocation11 [shape = 'u8[8192]{0}', space=vmem, size = 0x2000, scoped, tag = 'input window, operand 4']
    #allocation12 [shape = 'u8[8192]{0}', space=vmem, size = 0x2000, scoped, tag = 'input window, operand 5']
    #allocation13 [shape = 's32[2]{0}', space=sflag, size = 0x8, scoped, tag = 'scoped memory for tpu_custom_call.1']
    #allocation14 [shape = 'u8[8192]{0}', space=vmem, size = 0x2000, scoped, tag = 'input window, operand 6']
    #allocation15 [shape = 'u8[8192]{0}', space=vmem, size = 0x2000, scoped, tag = 'input window, operand 7, single buffered']
    #allocation16 [shape = 's32[1]{0}', space=sflag, size = 0x4, scoped, tag = 'scoped memory for tpu_custom_call.1']
    #allocation17 [shape = 'u8[512]{0}', space=smem, size = 0x200, scoped, tag = 'input window, operand 11, single buffered']
    #allocation18 [shape = 'u8[1024]{0}', space=vmem, size = 0x400, scoped, tag = 'output window, operand 0']
    %17 = vsyncpa [#allocation3], 0
    %s18 = scalar_lea.sflag [#allocation3], 1
    %19 = vsyncpa %s18, 0
    %20 = vsyncpa [#allocation7], 0
    %s21 = scalar_lea.sflag [#allocation7], 1
    %22 = vsyncpa %s21, 0
    %23 = vsyncpa [#allocation10], 0
    %s24 = scalar_lea.sflag [#allocation10], 1
    %25 = vsyncpa %s24, 0
    %26 = vsyncpa [#allocation13], 0
    %s27 = scalar_lea.sflag [#allocation13], 1
    %28 = vsyncpa %s27, 0
    %29 = vsyncpa [#allocation16], 0
    %30 = vsyncpa [#allocation5], 0
    %31 = vsyncpa [#allocation4], 0
    %s32 = scalar_lea.sflag [#allocation4], 1
    %33 = vsyncpa %s32, 0
    loop: start=0, step=1, limit=4
    $region2: #{tpu_custom_call.1} parent=1 // loop_pre_header
      _
    $region3: #{tpu_custom_call.1} parent=1 // loop_header
      %s35 = sphi 0, %s39
      %p36 = scmp.ge.s32.totalorder %s35, 4
      %s45 = sphi 0, %s47
      %s48 = sphi 0, %s45
      %s49 = sphi 0, %s48
      %s65 = sphi 0, %s49
      %s71 = sphi 0, %s73
      %s74 = sphi 0, %s71
      %s75 = sphi 0, %s74
      %s91 = sphi 0, %s75
      %s97 = sphi 0, %s99
      %s100 = sphi 0, %s97
      %s101 = sphi 0, %s100
      %s117 = sphi 0, %s101
      %s123 = sphi 0, %s125
      %s126 = sphi 0, %s123
      %s127 = sphi 0, %s126
      %s143 = sphi 0, %s127
      %s149 = sphi 0, %s151
      %s152 = sphi 0, %s149
      %s153 = sphi 0, %s152
      %s169 = sphi 0, %s153
      %s175 = sphi 0, %s177
      %s178 = sphi 0, %s175
      %s179 = sphi 0, %s178
      %s195 = sphi 0, %s179
      %s201 = sphi 0, %s203
      %s204 = sphi 0, %s201
      %s205 = sphi 0, %s204
      %s221 = sphi 0, %s205
      %s225 = sphi 0, %s225
      %s227 = sphi 0, %s225
      %s228 = sphi 0, %s227
      %s242 = sphi 0, %s228
      %s246 = sphi 0, %s246
      %s248 = sphi 0, %s246
      %s249 = sphi 0, %s248
      %s263 = sphi 0, %s249
      %s267 = sphi 0, %s267
      %s269 = sphi 0, %s267
      %s270 = sphi 0, %s269
      %s284 = sphi 0, %s270
      %s288 = sphi 0, %s288
      %s290 = sphi 0, %s288
      %s291 = sphi 0, %s290
      %s305 = sphi 0, %s291
      %s309 = sphi 0, %s309
      %s311 = sphi 0, %s309
      %s312 = sphi 0, %s311
      %s326 = sphi 0, %s312
      %s332 = sphi 0, %s334
      %s335 = sphi 0, %s332
      %s336 = sphi 0, %s335
      %s352 = sphi 0, %s336
    $region4: #{tpu_custom_call.1} parent=1 // loop_header_branch
      %38 = sbr.rel (%p36) target = $region8
    $region5: #{tpu_custom_call.1} parent=1 // loop_body
      %s40 = ssub.s32 %s35, 1
      %s41 = ssub.s32 %s35, 2
      %s42 = sadd.s32 %s35, 1
      %s43 = ssub.s32 %s35, %s42
      %p44 = scmp.eq.s32.totalorder %s43, 0
      %s46 = sadd.s32 %s45, 1
      %s47 = scalar_select %p44, %s45, %s46
      %p50 = pneg %p44
      %p51 = scmp.eq.s32.totalorder %s35, 1
      %p52 = por %p50, %p51
      %p53 = scmp.ne.s32.totalorder %s45, %s48
      %p54 = scmp.eq.s32.totalorder %s35, 0
      %p55 = por %p53, %p54
      %p56 = scmp.ne.s32.totalorder %s45, %s48
      %p57 = scmp.eq.s32.totalorder %s40, 1
      %p58 = por %p56, %p57
      %p59 = scmp.ne.s32.totalorder %s48, %s49
      %p60 = scmp.eq.s32.totalorder %s40, 0
      %p61 = por %p59, %p60
      %p62 = scmp.ne.s32.totalorder %s48, %s49
      %p63 = scmp.eq.s32.totalorder %s41, 1
      %p64 = por %p62, %p63
      %p66 = scmp.ne.s32.totalorder %s49, %s65
      %p67 = scmp.eq.s32.totalorder %s41, 0
      %p68 = por %p66, %p67
      %s69 = ssub.s32 %s35, %s42
      %p70 = scmp.eq.s32.totalorder %s69, 0
      %s72 = sadd.s32 %s71, 1
      %s73 = scalar_select %p70, %s71, %s72
      %p76 = pneg %p70
      %p77 = scmp.eq.s32.totalorder %s35, 1
      %p78 = por %p76, %p77
      %p79 = scmp.ne.s32.totalorder %s71, %s74
      %p80 = scmp.eq.s32.totalorder %s35, 0
      %p81 = por %p79, %p80
      %p82 = scmp.ne.s32.totalorder %s71, %s74
      %p83 = scmp.eq.s32.totalorder %s40, 1
      %p84 = por %p82, %p83
      %p85 = scmp.ne.s32.totalorder %s74, %s75
      %p86 = scmp.eq.s32.totalorder %s40, 0
      %p87 = por %p85, %p86
      %p88 = scmp.ne.s32.totalorder %s74, %s75
      %p89 = scmp.eq.s32.totalorder %s41, 1
      %p90 = por %p88, %p89
      %p92 = scmp.ne.s32.totalorder %s75, %s91
      %p93 = scmp.eq.s32.totalorder %s41, 0
      %p94 = por %p92, %p93
      %s95 = ssub.s32 %s35, %s42
      %p96 = scmp.eq.s32.totalorder %s95, 0
      %s98 = sadd.s32 %s97, 1
      %s99 = scalar_select %p96, %s97, %s98
      %p102 = pneg %p96
      %p103 = scmp.eq.s32.totalorder %s35, 1
      %p104 = por %p102, %p103
      %p105 = scmp.ne.s32.totalorder %s97, %s100
      %p106 = scmp.eq.s32.totalorder %s35, 0
      %p107 = por %p105, %p106
      %p108 = scmp.ne.s32.totalorder %s97, %s100
      %p109 = scmp.eq.s32.totalorder %s40, 1
      %p110 = por %p108, %p109
      %p111 = scmp.ne.s32.totalorder %s100, %s101
      %p112 = scmp.eq.s32.totalorder %s40, 0
      %p113 = por %p111, %p112
      %p114 = scmp.ne.s32.totalorder %s100, %s101
      %p115 = scmp.eq.s32.totalorder %s41, 1
      %p116 = por %p114, %p115
      %p118 = scmp.ne.s32.totalorder %s101, %s117
      %p119 = scmp.eq.s32.totalorder %s41, 0
      %p120 = por %p118, %p119
      %s121 = ssub.s32 %s35, %s42
      %p122 = scmp.eq.s32.totalorder %s121, 0
      %s124 = sadd.s32 %s123, 1
      %s125 = scalar_select %p122, %s123, %s124
      %p128 = pneg %p122
      %p129 = scmp.eq.s32.totalorder %s35, 1
      %p130 = por %p128, %p129
      %p131 = scmp.ne.s32.totalorder %s123, %s126
      %p132 = scmp.eq.s32.totalorder %s35, 0
      %p133 = por %p131, %p132
      %p134 = scmp.ne.s32.totalorder %s123, %s126
      %p135 = scmp.eq.s32.totalorder %s40, 1
      %p136 = por %p134, %p135
      %p137 = scmp.ne.s32.totalorder %s126, %s127
      %p138 = scmp.eq.s32.totalorder %s40, 0
      %p139 = por %p137, %p138
      %p140 = scmp.ne.s32.totalorder %s126, %s127
      %p141 = scmp.eq.s32.totalorder %s41, 1
      %p142 = por %p140, %p141
      %p144 = scmp.ne.s32.totalorder %s127, %s143
      %p145 = scmp.eq.s32.totalorder %s41, 0
      %p146 = por %p144, %p145
      %s147 = ssub.s32 %s35, %s42
      %p148 = scmp.eq.s32.totalorder %s147, 0
      %s150 = sadd.s32 %s149, 1
      %s151 = scalar_select %p148, %s149, %s150
      %p154 = pneg %p148
      %p155 = scmp.eq.s32.totalorder %s35, 1
      %p156 = por %p154, %p155
      %p157 = scmp.ne.s32.totalorder %s149, %s152
      %p158 = scmp.eq.s32.totalorder %s35, 0
      %p159 = por %p157, %p158
      %p160 = scmp.ne.s32.totalorder %s149, %s152
      %p161 = scmp.eq.s32.totalorder %s40, 1
      %p162 = por %p160, %p161
      %p163 = scmp.ne.s32.totalorder %s152, %s153
      %p164 = scmp.eq.s32.totalorder %s40, 0
      %p165 = por %p163, %p164
      %p166 = scmp.ne.s32.totalorder %s152, %s153
      %p167 = scmp.eq.s32.totalorder %s41, 1
      %p168 = por %p166, %p167
      %p170 = scmp.ne.s32.totalorder %s153, %s169
      %p171 = scmp.eq.s32.totalorder %s41, 0
      %p172 = por %p170, %p171
      %s173 = ssub.s32 %s35, %s42
      %p174 = scmp.eq.s32.totalorder %s173, 0
      %s176 = sadd.s32 %s175, 1
      %s177 = scalar_select %p174, %s175, %s176
      %p180 = pneg %p174
      %p181 = scmp.eq.s32.totalorder %s35, 1
      %p182 = por %p180, %p181
      %p183 = scmp.ne.s32.totalorder %s175, %s178
      %p184 = scmp.eq.s32.totalorder %s35, 0
      %p185 = por %p183, %p184
      %p186 = scmp.ne.s32.totalorder %s175, %s178
      %p187 = scmp.eq.s32.totalorder %s40, 1
      %p188 = por %p186, %p187
      %p189 = scmp.ne.s32.totalorder %s178, %s179
      %p190 = scmp.eq.s32.totalorder %s40, 0
      %p191 = por %p189, %p190
      %p192 = scmp.ne.s32.totalorder %s178, %s179
      %p193 = scmp.eq.s32.totalorder %s41, 1
      %p194 = por %p192, %p193
      %p196 = scmp.ne.s32.totalorder %s179, %s195
      %p197 = scmp.eq.s32.totalorder %s41, 0
      %p198 = por %p196, %p197
      %s199 = ssub.s32 %s35, %s42
      %p200 = scmp.eq.s32.totalorder %s199, 0
      %s202 = sadd.s32 %s201, 1
      %s203 = scalar_select %p200, %s201, %s202
      %p206 = pneg %p200
      %p207 = scmp.eq.s32.totalorder %s35, 1
      %p208 = por %p206, %p207
      %p209 = scmp.ne.s32.totalorder %s201, %s204
      %p210 = scmp.eq.s32.totalorder %s35, 0
      %p211 = por %p209, %p210
      %p212 = scmp.ne.s32.totalorder %s201, %s204
      %p213 = scmp.eq.s32.totalorder %s40, 1
      %p214 = por %p212, %p213
      %p215 = scmp.ne.s32.totalorder %s204, %s205
      %p216 = scmp.eq.s32.totalorder %s40, 0
      %p217 = por %p215, %p216
      %p218 = scmp.ne.s32.totalorder %s204, %s205
      %p219 = scmp.eq.s32.totalorder %s41, 1
      %p220 = por %p218, %p219
      %p222 = scmp.ne.s32.totalorder %s205, %s221
      %p223 = scmp.eq.s32.totalorder %s41, 0
      %p224 = por %p222, %p223
      %s226 = sadd.s32 %s225, 1
      %p229 = scmp.eq.s32.totalorder %s35, 1
      %p230 = scmp.ne.s32.totalorder %s225, %s227
      %p231 = scmp.eq.s32.totalorder %s35, 0
      %p232 = por %p230, %p231
      %p233 = scmp.ne.s32.totalorder %s225, %s227
      %p234 = scmp.eq.s32.totalorder %s40, 1
      %p235 = por %p233, %p234
      %p236 = scmp.ne.s32.totalorder %s227, %s228
      %p237 = scmp.eq.s32.totalorder %s40, 0
      %p238 = por %p236, %p237
      %p239 = scmp.ne.s32.totalorder %s227, %s228
      %p240 = scmp.eq.s32.totalorder %s41, 1
      %p241 = por %p239, %p240
      %p243 = scmp.ne.s32.totalorder %s228, %s242
      %p244 = scmp.eq.s32.totalorder %s41, 0
      %p245 = por %p243, %p244
      %s247 = sadd.s32 %s246, 1
      %p250 = scmp.eq.s32.totalorder %s35, 1
      %p251 = scmp.ne.s32.totalorder %s246, %s248
      %p252 = scmp.eq.s32.totalorder %s35, 0
      %p253 = por %p251, %p252
      %p254 = scmp.ne.s32.totalorder %s246, %s248
      %p255 = scmp.eq.s32.totalorder %s40, 1
      %p256 = por %p254, %p255
      %p257 = scmp.ne.s32.totalorder %s248, %s249
      %p258 = scmp.eq.s32.totalorder %s40, 0
      %p259 = por %p257, %p258
      %p260 = scmp.ne.s32.totalorder %s248, %s249
      %p261 = scmp.eq.s32.totalorder %s41, 1
      %p262 = por %p260, %p261
      %p264 = scmp.ne.s32.totalorder %s249, %s263
      %p265 = scmp.eq.s32.totalorder %s41, 0
      %p266 = por %p264, %p265
      %s268 = sadd.s32 %s267, 1
      %p271 = scmp.eq.s32.totalorder %s35, 1
      %p272 = scmp.ne.s32.totalorder %s267, %s269
      %p273 = scmp.eq.s32.totalorder %s35, 0
      %p274 = por %p272, %p273
      %p275 = scmp.ne.s32.totalorder %s267, %s269
      %p276 = scmp.eq.s32.totalorder %s40, 1
      %p277 = por %p275, %p276
      %p278 = scmp.ne.s32.totalorder %s269, %s270
      %p279 = scmp.eq.s32.totalorder %s40, 0
      %p280 = por %p278, %p279
      %p281 = scmp.ne.s32.totalorder %s269, %s270
      %p282 = scmp.eq.s32.totalorder %s41, 1
      %p283 = por %p281, %p282
      %p285 = scmp.ne.s32.totalorder %s270, %s284
      %p286 = scmp.eq.s32.totalorder %s41, 0
      %p287 = por %p285, %p286
      %s289 = sadd.s32 %s288, 1
      %p292 = scmp.eq.s32.totalorder %s35, 1
      %p293 = scmp.ne.s32.totalorder %s288, %s290
      %p294 = scmp.eq.s32.totalorder %s35, 0
      %p295 = por %p293, %p294
      %p296 = scmp.ne.s32.totalorder %s288, %s290
      %p297 = scmp.eq.s32.totalorder %s40, 1
      %p298 = por %p296, %p297
      %p299 = scmp.ne.s32.totalorder %s290, %s291
      %p300 = scmp.eq.s32.totalorder %s40, 0
      %p301 = por %p299, %p300
      %p302 = scmp.ne.s32.totalorder %s290, %s291
      %p303 = scmp.eq.s32.totalorder %s41, 1
      %p304 = por %p302, %p303
      %p306 = scmp.ne.s32.totalorder %s291, %s305
      %p307 = scmp.eq.s32.totalorder %s41, 0
      %p308 = por %p306, %p307
      %s310 = sadd.s32 %s309, 1
      %p313 = scmp.eq.s32.totalorder %s35, 1
      %p314 = scmp.ne.s32.totalorder %s309, %s311
      %p315 = scmp.eq.s32.totalorder %s35, 0
      %p316 = por %p314, %p315
      %p317 = scmp.ne.s32.totalorder %s309, %s311
      %p318 = scmp.eq.s32.totalorder %s40, 1
      %p319 = por %p317, %p318
      %p320 = scmp.ne.s32.totalorder %s311, %s312
      %p321 = scmp.eq.s32.totalorder %s40, 0
      %p322 = por %p320, %p321
      %p323 = scmp.ne.s32.totalorder %s311, %s312
      %p324 = scmp.eq.s32.totalorder %s41, 1
      %p325 = por %p323, %p324
      %p327 = scmp.ne.s32.totalorder %s312, %s326
      %p328 = scmp.eq.s32.totalorder %s41, 0
      %p329 = por %p327, %p328
      %s330 = ssub.s32 %s35, %s42
      %p331 = scmp.eq.s32.totalorder %s330, 0
      %s333 = sadd.s32 %s332, 1
      %s334 = scalar_select %p331, %s332, %s333
      %p337 = pneg %p331
      %p338 = scmp.eq.s32.totalorder %s35, 1
      %p339 = por %p337, %p338
      %p340 = scmp.ne.s32.totalorder %s332, %s335
      %p341 = scmp.eq.s32.totalorder %s35, 0
      %p342 = por %p340, %p341
      %p343 = scmp.ne.s32.totalorder %s332, %s335
      %p344 = scmp.eq.s32.totalorder %s40, 1
      %p345 = por %p343, %p344
      %p346 = scmp.ne.s32.totalorder %s335, %s336
      %p347 = scmp.eq.s32.totalorder %s40, 0
      %p348 = por %p346, %p347
      %p349 = scmp.ne.s32.totalorder %s335, %s336
      %p350 = scmp.eq.s32.totalorder %s41, 1
      %p351 = por %p349, %p350
      %p353 = scmp.ne.s32.totalorder %s336, %s352
      %p354 = scmp.eq.s32.totalorder %s41, 0
      %p355 = por %p353, %p354
      %p356 = scmp.le.s32.totalorder 1, %s35
      %p357 = scmp.lt.s32.totalorder %s35, 3
      %p358 = pnand %p356, %p357
      %p359 = pneg %p358
      // Predicated region
      $region9: #{tpu_custom_call.1} parent=5 // pred_check
        _
      $region10: #{tpu_custom_call.1} parent=5 // pred_check_branch
        %361 = sbr.rel (%p358) target = $region12
      $region11: #{tpu_custom_call.1} parent=5 // pred_region
        %s362 = ssub.s32 %s35, 1
        // Predicated region
        $region13: #{tpu_custom_call.1} parent=11 // pred_check
          %p363 = pneg %p238
        $region14: #{tpu_custom_call.1} parent=11 // pred_check_branch
          %365 = sbr.rel (%p363) target = $region16
        $region15: #{tpu_custom_call.1} parent=11 // pred_region
          %s367 = ssub.s32 256, 256
          %368 = vsyncadd [#allocation16], %s367
          %s369 = sshll.u32 [#allocation15], 4
          %s370 = int_to_ptr.vmem [resolvable:$true] %s369
          %375 = dma.hbm_to_vmem [thread:$0]  %s7, 256, %s370, [#allocation16], 128, 128, 8
        $region16: #{tpu_custom_call.1} parent=11 // pred_fallthru
          _
        // Predicated region
        $region17: #{tpu_custom_call.1} parent=11 // pred_check
          %p376 = pneg %p259
        $region18: #{tpu_custom_call.1} parent=11 // pred_check_branch
          %378 = sbr.rel (%p376) target = $region20
        $region19: #{tpu_custom_call.1} parent=11 // pred_region
          _
        $region20: #{tpu_custom_call.1} parent=11 // pred_fallthru
          _
        // Predicated region
        $region21: #{tpu_custom_call.1} parent=11 // pred_check
          %p379 = pneg %p280
        $region22: #{tpu_custom_call.1} parent=11 // pred_check_branch
          %381 = sbr.rel (%p379) target = $region24
        $region23: #{tpu_custom_call.1} parent=11 // pred_region
          _
        $region24: #{tpu_custom_call.1} parent=11 // pred_fallthru
          _
        // Predicated region
        $region25: #{tpu_custom_call.1} parent=11 // pred_check
          %p382 = pneg %p301
        $region26: #{tpu_custom_call.1} parent=11 // pred_check_branch
          %384 = sbr.rel (%p382) target = $region28
        $region27: #{tpu_custom_call.1} parent=11 // pred_region
          _
        $region28: #{tpu_custom_call.1} parent=11 // pred_fallthru
          _
        // Predicated region
        $region29: #{tpu_custom_call.1} parent=11 // pred_check
          %p385 = pneg %p322
        $region30: #{tpu_custom_call.1} parent=11 // pred_check_branch
          %387 = sbr.rel (%p385) target = $region32
        $region31: #{tpu_custom_call.1} parent=11 // pred_region
          %s389 = ssub.s32 16, 16
          %390 = vsyncadd [#allocation5], %s389
          %s392 = sshll.u32 %s11, 4
          %s393 = int_to_ptr.vmem [resolvable:$true] %s392
          %395 = dma.vmem_to_smem %s393, 16, [#allocation17], [#allocation5]
        $region32: #{tpu_custom_call.1} parent=11 // pred_fallthru
          _
      $region12: #{tpu_custom_call.1} parent=5 // pred_fallthru
        _
      %p396 = scmp.lt.s32.totalorder %s35, 2
      // Predicated region
      $region33: #{tpu_custom_call.1} parent=5 // pred_check
        %p397 = pneg %p396
      $region34: #{tpu_custom_call.1} parent=5 // pred_check_branch
        %399 = sbr.rel (%p397) target = $region36
      $region35: #{tpu_custom_call.1} parent=5 // pred_region
        // Predicated region
        $region37: #{tpu_custom_call.1} parent=35 // pred_check
          %p400 = pneg %p55
        $region38: #{tpu_custom_call.1} parent=35 // pred_check_branch
          %402 = sbr.rel (%p400) target = $region40
        $region39: #{tpu_custom_call.1} parent=35 // pred_region
          %s403 = sand.u32 %s45, 1
          %s404 = scalar_lea.sflag [#allocation3], %s403
          %s405 = sand.u32 %s45, 1
          %s406 = smul.addr %s405, 8
          %s407 = scalar_lea.vmem [#allocation2], %s406
          %s409 = ssub.s32 128, 128
          %410 = vsyncadd %s404, %s409
          %s411 = smul.addr %s35, 128
          %s412 = scalar_lea.hbm %s0, %s411
          %s414 = sshll.u32 %s407, 4
          %s415 = int_to_ptr.vmem [resolvable:$true] %s414
          %417 = dma.hbm_to_vmem [thread:$0]  %s412, 128, %s415, %s404
        $region40: #{tpu_custom_call.1} parent=35 // pred_fallthru
          _
        // Predicated region
        $region41: #{tpu_custom_call.1} parent=35 // pred_check
          %p418 = pneg %p81
        $region42: #{tpu_custom_call.1} parent=35 // pred_check_branch
          %420 = sbr.rel (%p418) target = $region44
        $region43: #{tpu_custom_call.1} parent=35 // pred_region
          %s421 = sand.u32 %s35, 1
          %s422 = scalar_lea.sflag [#allocation7], %s421
          %s423 = sand.u32 %s71, 1
          %s424 = smul.addr %s423, 8
          %s425 = scalar_lea.vmem [#allocation6], %s424
          %s427 = ssub.s32 128, 128
          %428 = vsyncadd %s422, %s427
          %s429 = smul.addr %s35, 128
          %s430 = scalar_lea.hbm %s1, %s429
          %s432 = sshll.u32 %s425, 4
          %s433 = int_to_ptr.vmem [resolvable:$true] %s432
          %435 = dma.hbm_to_vmem [thread:$0]  %s430, 128, %s433, %s422
        $region44: #{tpu_custom_call.1} parent=35 // pred_fallthru
          _
        // Predicated region
        $region45: #{tpu_custom_call.1} parent=35 // pred_check
          %p436 = pneg %p107
        $region46: #{tpu_custom_call.1} parent=35 // pred_check_branch
          %438 = sbr.rel (%p436) target = $region48
        $region47: #{tpu_custom_call.1} parent=35 // pred_region
          %s439 = sand.u32 %s35, 1
          %s440 = scalar_lea.sflag [#allocation7], %s439
          %s441 = sand.u32 %s97, 1
          %s442 = smul.addr %s441, 8
          %s443 = scalar_lea.vmem [#allocation8], %s442
          %s445 = ssub.s32 128, 128
          %446 = vsyncadd %s440, %s445
          %s447 = smul.addr %s35, 128
          %s448 = scalar_lea.hbm %s2, %s447
          %s450 = sshll.u32 %s443, 4
          %s451 = int_to_ptr.vmem [resolvable:$true] %s450
          %453 = dma.hbm_to_vmem [thread:$0]  %s448, 128, %s451, %s440
        $region48: #{tpu_custom_call.1} parent=35 // pred_fallthru
          _
        // Predicated region
        $region49: #{tpu_custom_call.1} parent=35 // pred_check
          %p454 = pneg %p133
        $region50: #{tpu_custom_call.1} parent=35 // pred_check_branch
          %456 = sbr.rel (%p454) target = $region52
        $region51: #{tpu_custom_call.1} parent=35 // pred_region
          %s457 = sand.u32 %s35, 1
          %s458 = scalar_lea.sflag [#allocation10], %s457
          %s459 = sand.u32 %s123, 1
          %s460 = smul.addr %s459, 8
          %s461 = scalar_lea.vmem [#allocation9], %s460
          %s463 = ssub.s32 128, 128
          %464 = vsyncadd %s458, %s463
          %s465 = smul.addr %s35, 128
          %s466 = scalar_lea.hbm %s3, %s465
          %s468 = sshll.u32 %s461, 4
          %s469 = int_to_ptr.vmem [resolvable:$true] %s468
          %471 = dma.hbm_to_vmem [thread:$0]  %s466, 128, %s469, %s458
        $region52: #{tpu_custom_call.1} parent=35 // pred_fallthru
          _
        // Predicated region
        $region53: #{tpu_custom_call.1} parent=35 // pred_check
          %p472 = pneg %p159
        $region54: #{tpu_custom_call.1} parent=35 // pred_check_branch
          %474 = sbr.rel (%p472) target = $region56
        $region55: #{tpu_custom_call.1} parent=35 // pred_region
          %s475 = sand.u32 %s35, 1
          %s476 = scalar_lea.sflag [#allocation10], %s475
          %s477 = sand.u32 %s149, 1
          %s478 = smul.addr %s477, 8
          %s479 = scalar_lea.vmem [#allocation11], %s478
          %s481 = ssub.s32 128, 128
          %482 = vsyncadd %s476, %s481
          %s483 = smul.addr %s35, 128
          %s484 = scalar_lea.hbm %s4, %s483
          %s486 = sshll.u32 %s479, 4
          %s487 = int_to_ptr.vmem [resolvable:$true] %s486
          %489 = dma.hbm_to_vmem [thread:$0]  %s484, 128, %s487, %s476
        $region56: #{tpu_custom_call.1} parent=35 // pred_fallthru
          _
        // Predicated region
        $region57: #{tpu_custom_call.1} parent=35 // pred_check
          %p490 = pneg %p185
        $region58: #{tpu_custom_call.1} parent=35 // pred_check_branch
          %492 = sbr.rel (%p490) target = $region60
        $region59: #{tpu_custom_call.1} parent=35 // pred_region
          %s493 = sand.u32 %s35, 1
          %s494 = scalar_lea.sflag [#allocation13], %s493
          %s495 = sand.u32 %s175, 1
          %s496 = smul.addr %s495, 8
          %s497 = scalar_lea.vmem [#allocation12], %s496
          %s499 = ssub.s32 128, 128
          %500 = vsyncadd %s494, %s499
          %s501 = smul.addr %s35, 128
          %s502 = scalar_lea.hbm %s5, %s501
          %s504 = sshll.u32 %s497, 4
          %s505 = int_to_ptr.vmem [resolvable:$true] %s504
          %507 = dma.hbm_to_vmem [thread:$0]  %s502, 128, %s505, %s494
        $region60: #{tpu_custom_call.1} parent=35 // pred_fallthru
          _
        // Predicated region
        $region61: #{tpu_custom_call.1} parent=35 // pred_check
          %p508 = pneg %p211
        $region62: #{tpu_custom_call.1} parent=35 // pred_check_branch
          %510 = sbr.rel (%p508) target = $region64
        $region63: #{tpu_custom_call.1} parent=35 // pred_region
          %s511 = sand.u32 %s35, 1
          %s512 = scalar_lea.sflag [#allocation13], %s511
          %s513 = sand.u32 %s201, 1
          %s514 = smul.addr %s513, 8
          %s515 = scalar_lea.vmem [#allocation14], %s514
          %s517 = ssub.s32 128, 128
          %518 = vsyncadd %s512, %s517
          %s519 = smul.addr %s35, 128
          %s520 = scalar_lea.hbm %s6, %s519
          %s522 = sshll.u32 %s515, 4
          %s523 = int_to_ptr.vmem [resolvable:$true] %s522
          %525 = dma.hbm_to_vmem [thread:$0]  %s520, 128, %s523, %s512
        $region64: #{tpu_custom_call.1} parent=35 // pred_fallthru
          _
      $region36: #{tpu_custom_call.1} parent=5 // pred_fallthru
        _
      %p526 = scmp.le.s32.totalorder 1, %s35
      %p527 = scmp.lt.s32.totalorder %s35, 3
      %p528 = pnand %p526, %p527
      %p529 = pneg %p528
      // Predicated region
      $region65: #{tpu_custom_call.1} parent=5 // pred_check
        _
      $region66: #{tpu_custom_call.1} parent=5 // pred_check_branch
        %531 = sbr.rel (%p528) target = $region68
      $region67: #{tpu_custom_call.1} parent=5 // pred_region
        %s532 = ssub.s32 %s35, 1
        %s533 = sand.u32 %s48, 1
        %s534 = scalar_lea.sflag [#allocation3], %s533
        %s535 = sand.u32 %s48, 1
        %s536 = smul.addr %s535, 8
        %s537 = scalar_lea.vmem [#allocation2], %s536
        // Predicated region
        $region69: #{tpu_custom_call.1} parent=67 // pred_check
          %p538 = pneg %p61
        $region70: #{tpu_custom_call.1} parent=67 // pred_check_branch
          %540 = sbr.rel (%p538) target = $region72
        $region71: #{tpu_custom_call.1} parent=67 // pred_region
          %541 = dma.done %s534, 128
        $region72: #{tpu_custom_call.1} parent=67 // pred_fallthru
          _
        %s542 = sand.u32 %s40, 1
        %s543 = scalar_lea.sflag [#allocation7], %s542
        %s544 = sand.u32 %s74, 1
        %s545 = smul.addr %s544, 8
        %s546 = scalar_lea.vmem [#allocation6], %s545
        // Predicated region
        $region73: #{tpu_custom_call.1} parent=67 // pred_check
          %p547 = pneg %p87
        $region74: #{tpu_custom_call.1} parent=67 // pred_check_branch
          %549 = sbr.rel (%p547) target = $region76
        $region75: #{tpu_custom_call.1} parent=67 // pred_region
          %550 = dma.done %s543, 128
        $region76: #{tpu_custom_call.1} parent=67 // pred_fallthru
          _
        %s551 = sand.u32 %s40, 1
        %s552 = scalar_lea.sflag [#allocation7], %s551
        %s553 = sand.u32 %s100, 1
        %s554 = smul.addr %s553, 8
        %s555 = scalar_lea.vmem [#allocation8], %s554
        // Predicated region
        $region77: #{tpu_custom_call.1} parent=67 // pred_check
          %p556 = pneg %p113
        $region78: #{tpu_custom_call.1} parent=67 // pred_check_branch
          %558 = sbr.rel (%p556) target = $region80
        $region79: #{tpu_custom_call.1} parent=67 // pred_region
          %559 = dma.done %s552, 128
        $region80: #{tpu_custom_call.1} parent=67 // pred_fallthru
          _
        %s560 = sand.u32 %s40, 1
        %s561 = scalar_lea.sflag [#allocation10], %s560
        %s562 = sand.u32 %s126, 1
        %s563 = smul.addr %s562, 8
        %s564 = scalar_lea.vmem [#allocation9], %s563
        // Predicated region
        $region81: #{tpu_custom_call.1} parent=67 // pred_check
          %p565 = pneg %p139
        $region82: #{tpu_custom_call.1} parent=67 // pred_check_branch
          %567 = sbr.rel (%p565) target = $region84
        $region83: #{tpu_custom_call.1} parent=67 // pred_region
          %568 = dma.done %s561, 128
        $region84: #{tpu_custom_call.1} parent=67 // pred_fallthru
          _
        %s569 = sand.u32 %s40, 1
        %s570 = scalar_lea.sflag [#allocation10], %s569
        %s571 = sand.u32 %s152, 1
        %s572 = smul.addr %s571, 8
        %s573 = scalar_lea.vmem [#allocation11], %s572
        // Predicated region
        $region85: #{tpu_custom_call.1} parent=67 // pred_check
          %p574 = pneg %p165
        $region86: #{tpu_custom_call.1} parent=67 // pred_check_branch
          %576 = sbr.rel (%p574) target = $region88
        $region87: #{tpu_custom_call.1} parent=67 // pred_region
          %577 = dma.done %s570, 128
        $region88: #{tpu_custom_call.1} parent=67 // pred_fallthru
          _
        %s578 = sand.u32 %s40, 1
        %s579 = scalar_lea.sflag [#allocation13], %s578
        %s580 = sand.u32 %s178, 1
        %s581 = smul.addr %s580, 8
        %s582 = scalar_lea.vmem [#allocation12], %s581
        // Predicated region
        $region89: #{tpu_custom_call.1} parent=67 // pred_check
          %p583 = pneg %p191
        $region90: #{tpu_custom_call.1} parent=67 // pred_check_branch
          %585 = sbr.rel (%p583) target = $region92
        $region91: #{tpu_custom_call.1} parent=67 // pred_region
          %586 = dma.done %s579, 128
        $region92: #{tpu_custom_call.1} parent=67 // pred_fallthru
          _
        %s587 = sand.u32 %s40, 1
        %s588 = scalar_lea.sflag [#allocation13], %s587
        %s589 = sand.u32 %s204, 1
        %s590 = smul.addr %s589, 8
        %s591 = scalar_lea.vmem [#allocation14], %s590
        // Predicated region
        $region93: #{tpu_custom_call.1} parent=67 // pred_check
          %p592 = pneg %p217
        $region94: #{tpu_custom_call.1} parent=67 // pred_check_branch
          %594 = sbr.rel (%p592) target = $region96
        $region95: #{tpu_custom_call.1} parent=67 // pred_region
          %595 = dma.done %s588, 128
        $region96: #{tpu_custom_call.1} parent=67 // pred_fallthru
          _
        // Predicated region
        $region97: #{tpu_custom_call.1} parent=67 // pred_check
          %p596 = pneg %p238
        $region98: #{tpu_custom_call.1} parent=67 // pred_check_branch
          %598 = sbr.rel (%p596) target = $region100
        $region99: #{tpu_custom_call.1} parent=67 // pred_region
          %599 = dma.done [#allocation16], 256
        $region100: #{tpu_custom_call.1} parent=67 // pred_fallthru
          _
        // Predicated region
        $region101: #{tpu_custom_call.1} parent=67 // pred_check
          %p600 = pneg %p322
        $region102: #{tpu_custom_call.1} parent=67 // pred_check_branch
          %602 = sbr.rel (%p600) target = $region104
        $region103: #{tpu_custom_call.1} parent=67 // pred_region
          %603 = dma.done [#allocation5], 16
        $region104: #{tpu_custom_call.1} parent=67 // pred_fallthru
          _
        %604 = sfence
        %s605 = sand.u32 %s48, 1
        %s606 = scalar_lea.sflag [#allocation3], %s605
        %s607 = sand.u32 %s48, 1
        %s608 = smul.addr %s607, 8
        %s609 = scalar_lea.vmem [#allocation2], %s608
        %p610 = pneg %p61
        %p611 = pneg %p58
        %s612 = sand.u32 %s40, 1
        %s613 = scalar_lea.sflag [#allocation7], %s612
        %s614 = sand.u32 %s74, 1
        %s615 = smul.addr %s614, 8
        %s616 = scalar_lea.vmem [#allocation6], %s615
        %p617 = pneg %p87
        %p618 = pneg %p84
        %s619 = sand.u32 %s40, 1
        %s620 = scalar_lea.sflag [#allocation7], %s619
        %s621 = sand.u32 %s100, 1
        %s622 = smul.addr %s621, 8
        %s623 = scalar_lea.vmem [#allocation8], %s622
        %p624 = pneg %p113
        %p625 = pneg %p110
        %s626 = sand.u32 %s40, 1
        %s627 = scalar_lea.sflag [#allocation10], %s626
        %s628 = sand.u32 %s126, 1
        %s629 = smul.addr %s628, 8
        %s630 = scalar_lea.vmem [#allocation9], %s629
        %p631 = pneg %p139
        %p632 = pneg %p136
        %s633 = sand.u32 %s40, 1
        %s634 = scalar_lea.sflag [#allocation10], %s633
        %s635 = sand.u32 %s152, 1
        %s636 = smul.addr %s635, 8
        %s637 = scalar_lea.vmem [#allocation11], %s636
        %p638 = pneg %p165
        %p639 = pneg %p162
        %s640 = sand.u32 %s40, 1
        %s641 = scalar_lea.sflag [#allocation13], %s640
        %s642 = sand.u32 %s178, 1
        %s643 = smul.addr %s642, 8
        %s644 = scalar_lea.vmem [#allocation12], %s643
        %p645 = pneg %p191
        %p646 = pneg %p188
        %s647 = sand.u32 %s40, 1
        %s648 = scalar_lea.sflag [#allocation13], %s647
        %s649 = sand.u32 %s204, 1
        %s650 = smul.addr %s649, 8
        %s651 = scalar_lea.vmem [#allocation14], %s650
        %p652 = pneg %p217
        %p653 = pneg %p214
        %p654 = pneg %p238
        %p655 = pneg %p235
        %p656 = pneg %p259
        %p657 = pneg %p256
        %p658 = pneg %p280
        %p659 = pneg %p277
        %p660 = pneg %p301
        %p661 = pneg %p298
        %p662 = pneg %p322
        %p663 = pneg %p319
        %p664 = pneg %p348
        %p665 = pneg %p345
        %s666 = sand.u32 %s335, 1
        %s667 = scalar_lea.sflag [#allocation4], %s666
        %s668 = sand.u32 %s335, 1
        %s669 = scalar_lea.vmem [#allocation18], %s668
        %v670 = vld [vmem:[#allocation15] sm:$0xff]
        %v671 = vld [vmem:[#allocation15 + $0x8] sm:$0xff]
        %v672 = vld [vmem:[%s8] sm:$0x1]
        %v673 = vld [vmem:[%s9] sm:$0x1]
        %s674 = sld [smem:[#allocation17]]
        %s675 = sld [smem:[#allocation17 + $0x1]]
        %v676 = vld [vmem:[%s537] sm:$0xff]
        %v677 = vld [vmem:[%s546] sm:$0xff]
        %v678 = vld [vmem:[%s555] sm:$0xff]
        %v679 = vld [vmem:[%s564] sm:$0xff]
        %vm680 = vcmask 130048
        %v682 = vsel %vm680, %v676, 0
        %v685 = vsel %vm680, %v677, 0
        %v688 = vsel %vm680, %v678, 0
        %v691 = vsel %vm680, %v679, 0
        %693 = vmatprep.subr.mxu0 0.0
        %694 = vmatpush1.msra.mxu0 %v670
        %695 = vmatprep.subr.mxu0 0.0
        %696 = vmatpush1.msra.mxu0 %v671
        %697 = vmatprep.subr.mxu0 0.0
        %698 = vmatpush1.msra.mxu0 0.0
        %699 = vmatprep.subr.mxu0 0.0
        %700 = vmatpush1.msra.mxu0 0.0
        %701 = vmatprep.subr.mxu0 0.0
        %702 = vmatpush1.msra.mxu0 0.0
        %703 = vmatprep.subr.mxu0 0.0
        %704 = vmatpush1.msra.mxu0 0.0
        %705 = vmatprep.subr.mxu0 0.0
        %706 = vmatpush1.msra.mxu0 0.0
        %707 = vmatprep.subr.mxu0 0.0
        %708 = vmatpush1.msra.mxu0 0.0
        %709 = vmatprep.subr.mxu0 0.0
        %710 = vmatpush1.msra.mxu0 0.0
        %711 = vmatprep.subr.mxu0 0.0
        %712 = vmatpush1.msra.mxu0 0.0
        %713 = vmatprep.subr.mxu0 0.0
        %714 = vmatpush1.msra.mxu0 0.0
        %715 = vmatprep.subr.mxu0 0.0
        %716 = vmatpush1.msra.mxu0 0.0
        %717 = vmatprep.subr.mxu0 0.0
        %718 = vmatpush1.msra.mxu0 0.0
        %719 = vmatprep.subr.mxu0 0.0
        %720 = vmatpush1.msra.mxu0 0.0
        %721 = vmatprep.subr.mxu0 0.0
        %722 = vmatpush1.msra.mxu0 0.0
        %723 = vmatprep.subr.mxu0 0.0
        %724 = vmatpush1.msra.mxu0 0.0
        %725 = vmatprep.subr.mxu0 0.0
        %726 = vmatpush1.msra.mxu0 0.0
        %727 = vmatprep.subr.mxu0 0.0
        %728 = vmatpush1.msra.mxu0 0.0
        %729 = vmatprep.subr.mxu0 0.0
        %730 = vmatpush1.msra.mxu0 0.0
        %731 = vmatprep.subr.mxu0 0.0
        %732 = vmatpush1.msra.mxu0 0.0
        %733 = vmatprep.subr.mxu0 0.0
        %734 = vmatpush1.msra.mxu0 0.0
        %735 = vmatprep.subr.mxu0 0.0
        %736 = vmatpush1.msra.mxu0 0.0
        %737 = vmatprep.subr.mxu0 0.0
        %738 = vmatpush1.msra.mxu0 0.0
        %739 = vmatprep.subr.mxu0 0.0
        %740 = vmatpush1.msra.mxu0 0.0
        %741 = vmatprep.subr.mxu0 0.0
        %742 = vmatpush1.msra.mxu0 0.0
        %743 = vmatprep.subr.mxu0 0.0
        %744 = vmatpush1.msra.mxu0 0.0
        %745 = vmatprep.subr.mxu0 0.0
        %746 = vmatpush1.msra.mxu0 0.0
        %747 = vmatprep.subr.mxu0 0.0
        %748 = vmatpush1.msra.mxu0 0.0
        %749 = vmatprep.subr.mxu0 0.0
        %750 = vmatpush1.msra.mxu0 0.0
        %751 = vmatprep.subr.mxu0 0.0
        %752 = vmatpush1.msra.mxu0 0.0
        %753 = vmatprep.subr.mxu0 0.0
        %754 = vmatpush1.msra.mxu0 0.0
        %755 = vmatprep.subr.mxu0 0.0
        %756 = vmatpush1.msra.mxu0 0.0
        %757 = vmatprep.mubr.f32.mxu0 0.0
        %758 = vmatmul.mubr.f32.gmra.mrb[0].mxu0 %v682
        %v759 = vpop.f32.mrb[0].mxu0
        %v760 = vadd.f32 0.0, %v759
        %v761 = vpop.f32.mrb[0].mxu0
        %762 = vmatprep.mubr.f32.mxu0 0.0
        %763 = vmatmul.mubr.f32.gmra.mrb[0].mxu0 %v685
        %v764 = vpop.f32.mrb[0].mxu0
        %v765 = vadd.f32 0.0, %v764
        %v766 = vpop.f32.mrb[0].mxu0
        %767 = vmatprep.mubr.f32.mxu0 0.0
        %768 = vmatmul.mubr.f32.gmra.mrb[0].mxu0 %v688
        %v769 = vpop.f32.mrb[0].mxu0
        %v770 = vadd.f32 0.0, %v769
        %v771 = vpop.f32.mrb[0].mxu0
        %772 = vmatprep.mubr.f32.mxu0 0.0
        %773 = vmatmul.mubr.f32.gmra.mrb[0].mxu0 %v691
        %v774 = vpop.f32.mrb[0].mxu0
        %v775 = vadd.f32 0.0, %v774
        %v776 = vpop.f32.mrb[0].mxu0
        %777 = vdwg.mxu0
        %779 = vrot.lane.b32.xlu0 %v765, 32
        %v780 = vpop.permute.xlu0 %779
        %vm782 = vcmask 261120
        %v783 = vsel %vm782, %v760, %v780
        %v784 = vld [vmem:[%s573] sm:$0xff]
        %v785 = vld [vmem:[%s582] sm:$0xff]
        %v786 = vld [vmem:[%s591] sm:$0xff]
        %v788 = vlaneseq
        %v789 = vshrl.u32 %v788, 7
        %v790 = vsub.s32 0, %v789
        %v791 = vrot.slane %v672, %v790
        %792 = vrot.lane.b32.xlu0 %v791, 32
        %v793 = vpop.permute.xlu0 %792
        %v795 = vsel %vm782, %v672, %v793
        %v797 = vlaneseq
        %v798 = vshrl.u32 %v797, 7
        %v799 = vsub.s32 0, %v798
        %v800 = vrot.slane %v673, %v799
        %801 = vrot.lane.b32.xlu0 %v800, 32
        %v802 = vpop.permute.xlu0 %801
        %v804 = vsel %vm782, %v673, %v802
        %v805 = vlaneseq
        %v806 = vshrl.u32 %v805, 7
        %v807 = vsub.s32 0, %v806
        %v808 = vrot.slane %v795, %v807
        %vm809 = vcmask 64512
        %v811 = vsel %vm809, %v784, 0
        %813 = vmatprep.subr.mxu0 0.0
        %814 = vmatpush1.msra.mxu0 %v783
        %815 = vmatprep.subr.mxu0 0.0
        %816 = vmatpush1.msra.mxu0 0.0
        %817 = vmatprep.subr.mxu0 0.0
        %818 = vmatpush1.msra.mxu0 0.0
        %819 = vmatprep.subr.mxu0 0.0
        %820 = vmatpush1.msra.mxu0 0.0
        %821 = vmatprep.subr.mxu0 0.0
        %822 = vmatpush1.msra.mxu0 0.0
        %823 = vmatprep.subr.mxu0 0.0
        %824 = vmatpush1.msra.mxu0 0.0
        %825 = vmatprep.subr.mxu0 0.0
        %826 = vmatpush1.msra.mxu0 0.0
        %827 = vmatprep.subr.mxu0 0.0
        %828 = vmatpush1.msra.mxu0 0.0
        %829 = vmatprep.subr.mxu0 0.0
        %830 = vmatpush1.msra.mxu0 0.0
        %831 = vmatprep.subr.mxu0 0.0
        %832 = vmatpush1.msra.mxu0 0.0
        %833 = vmatprep.subr.mxu0 0.0
        %834 = vmatpush1.msra.mxu0 0.0
        %835 = vmatprep.subr.mxu0 0.0
        %836 = vmatpush1.msra.mxu0 0.0
        %837 = vmatprep.subr.mxu0 0.0
        %838 = vmatpush1.msra.mxu0 0.0
        %839 = vmatprep.subr.mxu0 0.0
        %840 = vmatpush1.msra.mxu0 0.0
        %841 = vmatprep.subr.mxu0 0.0
        %842 = vmatpush1.msra.mxu0 0.0
        %843 = vmatprep.subr.mxu0 0.0
        %844 = vmatpush1.msra.mxu0 0.0
        %845 = vmatprep.subr.mxu0 0.0
        %846 = vmatpush1.msra.mxu0 0.0
        %847 = vmatprep.subr.mxu0 0.0
        %848 = vmatpush1.msra.mxu0 0.0
        %849 = vmatprep.subr.mxu0 0.0
        %850 = vmatpush1.msra.mxu0 0.0
        %851 = vmatprep.subr.mxu0 0.0
        %852 = vmatpush1.msra.mxu0 0.0
        %853 = vmatprep.subr.mxu0 0.0
        %854 = vmatpush1.msra.mxu0 0.0
        %855 = vmatprep.subr.mxu0 0.0
        %856 = vmatpush1.msra.mxu0 0.0
        %857 = vmatprep.subr.mxu0 0.0
        %858 = vmatpush1.msra.mxu0 0.0
        %859 = vmatprep.subr.mxu0 0.0
        %860 = vmatpush1.msra.mxu0 0.0
        %861 = vmatprep.subr.mxu0 0.0
        %862 = vmatpush1.msra.mxu0 0.0
        %863 = vmatprep.subr.mxu0 0.0
        %864 = vmatpush1.msra.mxu0 0.0
        %865 = vmatprep.subr.mxu0 0.0
        %866 = vmatpush1.msra.mxu0 0.0
        %867 = vmatprep.subr.mxu0 0.0
        %868 = vmatpush1.msra.mxu0 0.0
        %869 = vmatprep.subr.mxu0 0.0
        %870 = vmatpush1.msra.mxu0 0.0
        %871 = vmatprep.subr.mxu0 0.0
        %872 = vmatpush1.msra.mxu0 0.0
        %873 = vmatprep.subr.mxu0 0.0
        %874 = vmatpush1.msra.mxu0 0.0
        %875 = vmatprep.subr.mxu0 0.0
        %876 = vmatpush1.msra.mxu0 0.0
        %877 = vmatprep.mubr.f32.mxu0 0.0
        %878 = vmatmul.mubr.f32.gmra.mrb[0].mxu0 %v811
        %v879 = vpop.f32.mrb[0].mxu0
        %v880 = vadd.f32 %v808, %v879
        %v881 = vpop.f32.mrb[0].mxu0
        %882 = vdwg.mxu0
        %vm883 = vcmp.gt.f32.partialorder %v880, 0.0
        %v884 = vstv %s674
        %v885 = vmul.f32 %v884, %v880
        %v886 = vsel %vm883, %v880, %v885
        %v887 = vlaneseq
        %v888 = vshrl.u32 %v887, 7
        %v889 = vsub.s32 0, %v888
        %v890 = vrot.slane %v804, %v889
        %v891 = vmul.f32 %v886, %v890
        %v894 = vsel %vm809, %v785, 0
        %896 = vmatprep.subr.mxu0 0.0
        %897 = vmatpush1.msra.mxu0 %v770
        %898 = vmatprep.subr.mxu0 0.0
        %899 = vmatpush1.msra.mxu0 0.0
        %900 = vmatprep.subr.mxu0 0.0
        %901 = vmatpush1.msra.mxu0 0.0
        %902 = vmatprep.subr.mxu0 0.0
        %903 = vmatpush1.msra.mxu0 0.0
        %904 = vmatprep.subr.mxu0 0.0
        %905 = vmatpush1.msra.mxu0 0.0
        %906 = vmatprep.subr.mxu0 0.0
        %907 = vmatpush1.msra.mxu0 0.0
        %908 = vmatprep.subr.mxu0 0.0
        %909 = vmatpush1.msra.mxu0 0.0
        %910 = vmatprep.subr.mxu0 0.0
        %911 = vmatpush1.msra.mxu0 0.0
        %912 = vmatprep.subr.mxu0 0.0
        %913 = vmatpush1.msra.mxu0 0.0
        %914 = vmatprep.subr.mxu0 0.0
        %915 = vmatpush1.msra.mxu0 0.0
        %916 = vmatprep.subr.mxu0 0.0
        %917 = vmatpush1.msra.mxu0 0.0
        %918 = vmatprep.subr.mxu0 0.0
        %919 = vmatpush1.msra.mxu0 0.0
        %920 = vmatprep.subr.mxu0 0.0
        %921 = vmatpush1.msra.mxu0 0.0
        %922 = vmatprep.subr.mxu0 0.0
        %923 = vmatpush1.msra.mxu0 0.0
        %924 = vmatprep.subr.mxu0 0.0
        %925 = vmatpush1.msra.mxu0 0.0
        %926 = vmatprep.subr.mxu0 0.0
        %927 = vmatpush1.msra.mxu0 0.0
        %928 = vmatprep.subr.mxu0 0.0
        %929 = vmatpush1.msra.mxu0 0.0
        %930 = vmatprep.subr.mxu0 0.0
        %931 = vmatpush1.msra.mxu0 0.0
        %932 = vmatprep.subr.mxu0 0.0
        %933 = vmatpush1.msra.mxu0 0.0
        %934 = vmatprep.subr.mxu0 0.0
        %935 = vmatpush1.msra.mxu0 0.0
        %936 = vmatprep.subr.mxu0 0.0
        %937 = vmatpush1.msra.mxu0 0.0
        %938 = vmatprep.subr.mxu0 0.0
        %939 = vmatpush1.msra.mxu0 0.0
        %940 = vmatprep.subr.mxu0 0.0
        %941 = vmatpush1.msra.mxu0 0.0
        %942 = vmatprep.subr.mxu0 0.0
        %943 = vmatpush1.msra.mxu0 0.0
        %944 = vmatprep.subr.mxu0 0.0
        %945 = vmatpush1.msra.mxu0 0.0
        %946 = vmatprep.subr.mxu0 0.0
        %947 = vmatpush1.msra.mxu0 0.0
        %948 = vmatprep.subr.mxu0 0.0
        %949 = vmatpush1.msra.mxu0 0.0
        %950 = vmatprep.subr.mxu0 0.0
        %951 = vmatpush1.msra.mxu0 0.0
        %952 = vmatprep.subr.mxu0 0.0
        %953 = vmatpush1.msra.mxu0 0.0
        %954 = vmatprep.subr.mxu0 0.0
        %955 = vmatpush1.msra.mxu0 0.0
        %956 = vmatprep.subr.mxu0 0.0
        %957 = vmatpush1.msra.mxu0 0.0
        %958 = vmatprep.subr.mxu0 0.0
        %959 = vmatpush1.msra.mxu0 0.0
        %960 = vmatprep.mubr.f32.mxu0 0.0
        %961 = vmatmul.mubr.f32.gmra.mrb[0].mxu0 %v894
        %v962 = vpop.f32.mrb[0].mxu0
        %v963 = vadd.f32 %v791, %v962
        %v964 = vpop.f32.mrb[0].mxu0
        %965 = vdwg.mxu0
        %vm966 = vcmp.gt.f32.partialorder %v963, 0.0
        %v967 = vmul.f32 %v884, %v963
        %v968 = vsel %vm966, %v963, %v967
        %v970 = vmul.f32 %v968, %v800
        %v972 = vsel %vm809, %v786, 0
        %974 = vmatprep.subr.mxu0 0.0
        %975 = vmatpush1.msra.mxu0 %v775
        %976 = vmatprep.subr.mxu0 0.0
        %977 = vmatpush1.msra.mxu0 0.0
        %978 = vmatprep.subr.mxu0 0.0
        %979 = vmatpush1.msra.mxu0 0.0
        %980 = vmatprep.subr.mxu0 0.0
        %981 = vmatpush1.msra.mxu0 0.0
        %982 = vmatprep.subr.mxu0 0.0
        %983 = vmatpush1.msra.mxu0 0.0
        %984 = vmatprep.subr.mxu0 0.0
        %985 = vmatpush1.msra.mxu0 0.0
        %986 = vmatprep.subr.mxu0 0.0
        %987 = vmatpush1.msra.mxu0 0.0
        %988 = vmatprep.subr.mxu0 0.0
        %989 = vmatpush1.msra.mxu0 0.0
        %990 = vmatprep.subr.mxu0 0.0
        %991 = vmatpush1.msra.mxu0 0.0
        %992 = vmatprep.subr.mxu0 0.0
        %993 = vmatpush1.msra.mxu0 0.0
        %994 = vmatprep.subr.mxu0 0.0
        %995 = vmatpush1.msra.mxu0 0.0
        %996 = vmatprep.subr.mxu0 0.0
        %997 = vmatpush1.msra.mxu0 0.0
        %998 = vmatprep.subr.mxu0 0.0
        %999 = vmatpush1.msra.mxu0 0.0
        %1000 = vmatprep.subr.mxu0 0.0
        %1001 = vmatpush1.msra.mxu0 0.0
        %1002 = vmatprep.subr.mxu0 0.0
        %1003 = vmatpush1.msra.mxu0 0.0
        %1004 = vmatprep.subr.mxu0 0.0
        %1005 = vmatpush1.msra.mxu0 0.0
        %1006 = vmatprep.subr.mxu0 0.0
        %1007 = vmatpush1.msra.mxu0 0.0
        %1008 = vmatprep.subr.mxu0 0.0
        %1009 = vmatpush1.msra.mxu0 0.0
        %1010 = vmatprep.subr.mxu0 0.0
        %1011 = vmatpush1.msra.mxu0 0.0
        %1012 = vmatprep.subr.mxu0 0.0
        %1013 = vmatpush1.msra.mxu0 0.0
        %1014 = vmatprep.subr.mxu0 0.0
        %1015 = vmatpush1.msra.mxu0 0.0
        %1016 = vmatprep.subr.mxu0 0.0
        %1017 = vmatpush1.msra.mxu0 0.0
        %1018 = vmatprep.subr.mxu0 0.0
        %1019 = vmatpush1.msra.mxu0 0.0
        %1020 = vmatprep.subr.mxu0 0.0
        %1021 = vmatpush1.msra.mxu0 0.0
        %1022 = vmatprep.subr.mxu0 0.0
        %1023 = vmatpush1.msra.mxu0 0.0
        %1024 = vmatprep.subr.mxu0 0.0
        %1025 = vmatpush1.msra.mxu0 0.0
        %1026 = vmatprep.subr.mxu0 0.0
        %1027 = vmatpush1.msra.mxu0 0.0
        %1028 = vmatprep.subr.mxu0 0.0
        %1029 = vmatpush1.msra.mxu0 0.0
        %1030 = vmatprep.subr.mxu0 0.0
        %1031 = vmatpush1.msra.mxu0 0.0
        %1032 = vmatprep.subr.mxu0 0.0
        %1033 = vmatpush1.msra.mxu0 0.0
        %1034 = vmatprep.subr.mxu0 0.0
        %1035 = vmatpush1.msra.mxu0 0.0
        %1036 = vmatprep.subr.mxu0 0.0
        %1037 = vmatpush1.msra.mxu0 0.0
        %1038 = vmatprep.mubr.f32.mxu0 0.0
        %1039 = vmatmul.mubr.f32.gmra.mrb[0].mxu0 %v972
        %v1040 = vpop.f32.mrb[0].mxu0
        %v1041 = vadd.f32 %v791, %v1040
        %v1042 = vpop.f32.mrb[0].mxu0
        %1043 = vdwg.mxu0
        %vm1044 = vcmp.gt.f32.partialorder %v1041, 0.0
        %v1045 = vmul.f32 %v884, %v1041
        %v1046 = vsel %vm1044, %v1041, %v1045
        %v1047 = vmul.f32 %v1046, %v800
        %v1048 = vsel %vm782, %v970, 0.0
        %v1049 = vrot.slane %v1048, 4
        %v1050 = vadd.f32 %v1048, %v1049
        %v1051 = vrot.slane %v1050, 2
        %v1052 = vadd.f32 %v1050, %v1051
        %v1053 = vrot.slane %v1052, 1
        %v1054 = vadd.f32 %v1052, %v1053
        %v1055 = vrcp.pop 8.0
        %v1056 = vmul.f32 %v1054, %v1055
        %v1057 = vxor.u32 %v1056, 2147483648
        %v1058 = vmul.f32 %v1057, 1.442695
        %v1059 = vpow.pop %v1058
        %v1060 = vadd.f32 %v1059, 1.0
        %v1061 = vrcp.pop %v1060
        %v1062 = vmul.f32 1.0, %v1061
        %v1063 = vsel %vm782, %v1047, 0.0
        %v1064 = vrot.slane %v1063, 4
        %v1065 = vadd.f32 %v1063, %v1064
        %v1066 = vrot.slane %v1065, 2
        %v1067 = vadd.f32 %v1065, %v1066
        %v1068 = vrot.slane %v1067, 1
        %v1069 = vadd.f32 %v1067, %v1068
        %v1070 = vmul.f32 %v1069, %v1055
        %v1071 = vxor.u32 %v1070, 2147483648
        %v1072 = vmul.f32 %v1071, 1.442695
        %v1073 = vpow.pop %v1072
        %v1074 = vadd.f32 %v1073, 1.0
        %v1075 = vrcp.pop %v1074
        %v1076 = vmul.f32 1.0, %v1075
        %v1077 = vadd.f32 %v1062, %v1076
        %v1078 = vld [vmem:[%s10] sm:$0xff]
        %v1079 = vld [vmem:[%s10 + $0x8] sm:$0xff]
        %v1080 = vld [vmem:[%s10 + $0x10] sm:$0xff]
        %v1081 = vld [vmem:[%s10 + $0x18] sm:$0xff]
        %v1083 = vsel %vm782, %v1077, 0
        %v1086 = vsel %vm782, %v1078, 0
        %v1089 = vsel %vm782, %v1079, 0
        %v1092 = vsel %vm782, %v1080, 0
        %v1095 = vsel %vm782, %v1081, 0
        %1097 = vmatprep.subr.mxu0 0.0
        %1098 = vmatpush1.xpose.msra.mxu0 %v1086
        %1099 = vmatprep.subr.mxu0 0.0
        %1100 = vmatpush1.xpose.msra.mxu0 %v1089
        %1101 = vmatprep.subr.mxu0 0.0
        %1102 = vmatpush1.xpose.msra.mxu0 %v1092
        %1103 = vmatprep.subr.mxu0 0.0
        %1104 = vmatpush1.xpose.msra.mxu0 %v1095
        %1105 = vmatprep.subr.mxu0 0.0
        %1106 = vmatpush1.xpose.msra.mxu0 0.0
        %1107 = vmatprep.subr.mxu0 0.0
        %1108 = vmatpush1.xpose.msra.mxu0 0.0
        %1109 = vmatprep.subr.mxu0 0.0
        %1110 = vmatpush1.xpose.msra.mxu0 0.0
        %1111 = vmatprep.subr.mxu0 0.0
        %1112 = vmatpush1.xpose.msra.mxu0 0.0
        %1113 = vmatprep.subr.mxu0 0.0
        %1114 = vmatpush1.xpose.msra.mxu0 0.0
        %1115 = vmatprep.subr.mxu0 0.0
        %1116 = vmatpush1.xpose.msra.mxu0 0.0
        %1117 = vmatprep.subr.mxu0 0.0
        %1118 = vmatpush1.xpose.msra.mxu0 0.0
        %1119 = vmatprep.subr.mxu0 0.0
        %1120 = vmatpush1.xpose.msra.mxu0 0.0
        %1121 = vmatprep.subr.mxu0 0.0
        %1122 = vmatpush1.xpose.msra.mxu0 0.0
        %1123 = vmatprep.subr.mxu0 0.0
        %1124 = vmatpush1.xpose.msra.mxu0 0.0
        %1125 = vmatprep.subr.mxu0 0.0
        %1126 = vmatpush1.xpose.msra.mxu0 0.0
        %1127 = vmatprep.subr.mxu0 0.0
        %1128 = vmatpush1.xpose.msra.mxu0 0.0
        %1129 = vmatprep.subr.mxu0 0.0
        %1130 = vmatpush1.xpose.msra.mxu0 0.0
        %1131 = vmatprep.subr.mxu0 0.0
        %1132 = vmatpush1.xpose.msra.mxu0 0.0
        %1133 = vmatprep.subr.mxu0 0.0
        %1134 = vmatpush1.xpose.msra.mxu0 0.0
        %1135 = vmatprep.subr.mxu0 0.0
        %1136 = vmatpush1.xpose.msra.mxu0 0.0
        %1137 = vmatprep.subr.mxu0 0.0
        %1138 = vmatpush1.xpose.msra.mxu0 0.0
        %1139 = vmatprep.subr.mxu0 0.0
        %1140 = vmatpush1.xpose.msra.mxu0 0.0
        %1141 = vmatprep.subr.mxu0 0.0
        %1142 = vmatpush1.xpose.msra.mxu0 0.0
        %1143 = vmatprep.subr.mxu0 0.0
        %1144 = vmatpush1.xpose.msra.mxu0 0.0
        %1145 = vmatprep.subr.mxu0 0.0
        %1146 = vmatpush1.xpose.msra.mxu0 0.0
        %1147 = vmatprep.subr.mxu0 0.0
        %1148 = vmatpush1.xpose.msra.mxu0 0.0
        %1149 = vmatprep.subr.mxu0 0.0
        %1150 = vmatpush1.xpose.msra.mxu0 0.0
        %1151 = vmatprep.subr.mxu0 0.0
        %1152 = vmatpush1.xpose.msra.mxu0 0.0
        %1153 = vmatprep.subr.mxu0 0.0
        %1154 = vmatpush1.xpose.msra.mxu0 0.0
        %1155 = vmatprep.subr.mxu0 0.0
        %1156 = vmatpush1.xpose.msra.mxu0 0.0
        %1157 = vmatprep.subr.mxu0 0.0
        %1158 = vmatpush1.xpose.msra.mxu0 0.0
        %1159 = vmatprep.subr.mxu0 0.0
        %1160 = vmatpush1.xpose.msra.mxu0 0.0
        %1161 = vmatprep.mubr.f32.mxu0 0.0
        %1162 = vmatmul.mubr.f32.gmra.mrb[0].mxu0 %v1083
        %v1163 = vpop.f32.mrb[0].mxu0
        %v1164 = vadd.f32 0.0, %v1163
        %v1165 = vpop.f32.mrb[0].mxu0
        %1166 = vdwg.mxu0
        %v1167 = vlaneseq
        %v1168 = vshrl.u32 %v1167, 7
        %v1169 = vsub.s32 0, %v1168
        %v1170 = vrot.slane %v1164, %v1169
        %v1171 = vmul.f32 %v891, %v1170
        %v1172 = vsel %vm782, %v1171, 0.0
        %1173 = vadd.xlane.f32.xlu0 %v1172
        %v1174 = vpop.xlane.xlu0 %1173
        %1176 = vrot.lane.b32.xlu0 %v1170, 32
        %v1177 = vpop.permute.xlu0 %1176
        %v1179 = vmul.f32 %v891, %v1177
        %1181 = vrot.lane.b32.xlu0 %v1179, 96
        %v1182 = vpop.permute.xlu0 %1181
        %v1184 = vsel %vm782, %v1182, 0.0
        %1185 = vadd.xlane.f32.xlu0 %v1184
        %v1186 = vpop.xlane.xlu0 %1185
        %v1188 = vlaneseq
        %v1189 = vand.u32 %v1188, 127
        %v1190 = vlaneseq
        %v1191 = vshrl.u32 %v1190, 7
        %v1192 = vsub.s32 %v1189, %v1191
        %v1193 = vrot.slane %v1174, %v1192
        %v1196 = vadd.s32 %v1189, 4294967288
        %v1197 = vlaneseq
        %v1198 = vshrl.u32 %v1197, 7
        %v1199 = vsub.s32 %v1196, %v1198
        %v1200 = vrot.slane %v1186, %v1199
        %v1202 = vsel %vm809, %v1193, %v1200
        %v1203 = vsel %vm680, %v1202, 0.0
        %s1204 = smul.f32 %s675, 2.0
        %v1205 = vstv %s1204
        %v1206 = vadd.f32 %v1203, %v1205
        %1207 = vst [vmem:[%s669] sm:$0x1] %v1206
        %s1208 = sand.u32 %s335, 1
        %s1209 = scalar_lea.sflag [#allocation4], %s1208
        %s1210 = sand.u32 %s335, 1
        %s1211 = scalar_lea.vmem [#allocation18], %s1210
        // Predicated region
        $region105: #{tpu_custom_call.1} parent=67 // pred_check
          %p1212 = pneg %p345
        $region106: #{tpu_custom_call.1} parent=67 // pred_check_branch
          %1214 = sbr.rel (%p1212) target = $region108
        $region107: #{tpu_custom_call.1} parent=67 // pred_region
          %s1216 = ssub.s32 16, 16
          %1217 = vsyncadd %s1209, %s1216
          %s1218 = smul.addr %s40, 16
          %s1219 = scalar_lea.hbm %s12, %s1218
          %s1221 = sshll.u32 %s1211, 4
          %s1222 = int_to_ptr.vmem [resolvable:$true] %s1221
          %1224 = dma.vmem_to_hbm [thread:$0]  %s1222, 16, %s1219, %s1209
        $region108: #{tpu_custom_call.1} parent=67 // pred_fallthru
          _
      $region68: #{tpu_custom_call.1} parent=5 // pred_fallthru
        _
      %p1225 = scmp.le.s32.totalorder 2, %s35
      // Predicated region
      $region109: #{tpu_custom_call.1} parent=5 // pred_check
        %p1226 = pneg %p1225
      $region110: #{tpu_custom_call.1} parent=5 // pred_check_branch
        %1228 = sbr.rel (%p1226) target = $region112
      $region111: #{tpu_custom_call.1} parent=5 // pred_region
        %s1229 = ssub.s32 %s35, 2
        // Predicated region
        $region113: #{tpu_custom_call.1} parent=111 // pred_check
          %p1230 = pneg %p351
        $region114: #{tpu_custom_call.1} parent=111 // pred_check_branch
          %1232 = sbr.rel (%p1230) target = $region116
        $region115: #{tpu_custom_call.1} parent=111 // pred_region
          %s1233 = sand.u32 %s336, 1
          %s1234 = scalar_lea.sflag [#allocation4], %s1233
          %s1235 = sand.u32 %s336, 1
          %s1236 = scalar_lea.vmem [#allocation18], %s1235
          %1237 = dma.done %s1234, 16
        $region116: #{tpu_custom_call.1} parent=111 // pred_fallthru
          _
      $region112: #{tpu_custom_call.1} parent=5 // pred_fallthru
        _
    $region6: #{tpu_custom_call.1} parent=1 // loop_footer
      %s39 = sadd.s32 1, %s35
    $region7: #{tpu_custom_call.1} parent=1 // loop_footer_branch
      %34 = sbr.rel target = $region3
    $region8: #{tpu_custom_call.1} parent=1 // loop_exit
      _
    %1238 = vsyncpa [#allocation3], 1
    %s1239 = scalar_lea.sflag [#allocation3], 1
    %1240 = vsyncpa %s1239, 1
    %1241 = vsyncpa [#allocation7], 1
    %s1242 = scalar_lea.sflag [#allocation7], 1
    %1243 = vsyncpa %s1242, 1
    %1244 = vsyncpa [#allocation10], 1
    %s1245 = scalar_lea.sflag [#allocation10], 1
    %1246 = vsyncpa %s1245, 1
    %1247 = vsyncpa [#allocation13], 1
    %s1248 = scalar_lea.sflag [#allocation13], 1
    %1249 = vsyncpa %s1248, 1
    %1250 = vsyncpa [#allocation16], 1
    %1251 = vsyncpa [#allocation4], 1
    %s1252 = scalar_lea.sflag [#allocation4], 1
    %1253 = vsyncpa %s1252, 1
    %1254 = vsyncpa [#allocation5], 1
    %s1255 = scalar_lea.sflag [#allocation5], 1
    %1256 = vsyncpa %s1255, 1

</llo_original>
